<compile_context>
chip_gen: v7x
topology: tpu7x:2x2x1
jax: 0.10.0
libtpu: 0.0.40
codegen_flags: <defaults>
</compile_context>

<pallas_src>
import functools
import math

import jax
import jax.numpy as jnp
import numpy as np
from jax.experimental import pallas as pl
from jax.experimental.pallas import tpu as pltpu

EPS = 1e-6


# ----------------------------- layer norm ---------------------------------
# torch LayerNormalization: alpha * (x - mean) / (std + eps) + bias
# torch.std is unbiased (Bessel-corrected) and eps is added to std (not var).

def _layer_norm(x, alpha, bias, eps=EPS):
    d = x.shape[-1]
    mean = jnp.mean(x, axis=-1, keepdims=True)
    var = jnp.sum((x - mean) ** 2, axis=-1, keepdims=True) / (d - 1)
    std = jnp.sqrt(var)
    # exact reciprocal: layernorm error feeds the kernel output directly
    return alpha * (x - mean) / (std + eps) + bias


# ------------------------------- kernel ------------------------------------

def encoder_kernel(x_ref, bias_ref,
                   wqkv_ref, bqkv_ref, wo_ref,
                   w1_ref, b1_ref, w2_ref,
                   small_ref, fnorm_ref,
                   o_ref, x_acc, *, num_heads, bt, seq):
    """Fused encoder.  grid = (batch_block, layer): Bt batch rows per b-step,
    one encoder block per l-step; activation carried in VMEM scratch."""
    l = pl.program_id(1)
    n_layers = pl.num_programs(1)

    # Load the input activations into the VMEM-resident accumulator once.
    @pl.when(l == 0)
    def _():
        for b in range(bt):
            x_acc[b * seq:(b + 1) * seq, :] = x_ref[b]

    x = x_acc[...]                          # (Bt*S, D) f32
    D = x.shape[-1]
    dk = D // num_heads
    scale = 1.0 / math.sqrt(dk)

    sp = small_ref[0]                       # (6, D): a1, g1, a2, g2, bo, b2
    a1, g1 = sp[0:1, :], sp[1:2, :]
    a2, g2 = sp[2:3, :], sp[3:4, :]
    bo, b2 = sp[4:5, :], sp[5:6, :]

    # ---- self-attention sublayer: x + MHA(norm(x)) ----
    xn = _layer_norm(x, a1, g1)
    qkv = jnp.dot(xn.astype(jnp.bfloat16), wqkv_ref[0],
                  preferred_element_type=jnp.float32) + bqkv_ref[0]
    qkv = qkv.astype(jnp.bfloat16)          # (Bt*S, 3D) -> matmul operands
    wo = wo_ref[0]                          # (D, D) bf16

    attn_rows = []
    for b in range(bt):                     # static unroll over batch rows
        r0 = b * seq
        mbias = bias_ref[b]                 # (1, S) additive 0 / -1e9 bias
        acc_b = jnp.zeros((seq, D), jnp.float32)
        for h in range(num_heads):          # static unroll over heads
            c0 = h * dk
            qh = qkv[r0:r0 + seq, c0:c0 + dk]
            kh = qkv[r0:r0 + seq, D + c0:D + c0 + dk]
            vh = qkv[r0:r0 + seq, 2 * D + c0:2 * D + c0 + dk]
            scores = jax.lax.dot_general(
                qh, kh, (((1,), (1,)), ((), ())),
                preferred_element_type=jnp.float32) * scale     # (S, S) f32
            scores = scores + mbias
            scores = scores - jnp.max(scores, axis=-1, keepdims=True)
            p = jnp.exp(scores)
            p = p * pl.reciprocal(jnp.sum(p, axis=-1, keepdims=True),
                                  approx=True)
            pv = jnp.dot(p.astype(jnp.bfloat16), vh,
                         preferred_element_type=jnp.float32)    # (S, dk)
            # Fuse the head concat into the output projection: per-head slab.
            acc_b = acc_b + jnp.dot(pv.astype(jnp.bfloat16), wo[c0:c0 + dk, :],
                                    preferred_element_type=jnp.float32)
        attn_rows.append(acc_b)
    attn = attn_rows[0] if bt == 1 else jnp.concatenate(attn_rows, axis=0)
    x = x + attn + bo          # dropout omitted (eval mode)

    # ---- feed-forward sublayer: x + FFN(norm(x)) ----
    xn2 = _layer_norm(x, a2, g2)
    hdn = jnp.maximum(
        jnp.dot(xn2.astype(jnp.bfloat16), w1_ref[0],
                preferred_element_type=jnp.float32) + b1_ref[0], 0.0)
    ff = jnp.dot(hdn.astype(jnp.bfloat16), w2_ref[0],
                 preferred_element_type=jnp.float32) + b2
    x = x + ff                 # dropout omitted (eval mode)

    x_acc[...] = x

    # After the last layer: final Encoder.norm, single HBM writeback.
    @pl.when(l == n_layers - 1)
    def _():
        out = _layer_norm(x, fnorm_ref[0:1, :], fnorm_ref[1:2, :])
        for b in range(bt):
            o_ref[b] = out[b * seq:(b + 1) * seq, :]


# ------------------------------ wrapper ------------------------------------

def encoder_forward(x, mask, params, bt=None):
    """x: (B, S, D) f32; mask: (B, S) f32 (1=attend, 0=masked)."""
    B, S, D = x.shape
    H = params["num_heads"]
    layers = params["layers"]
    L = len(layers)
    dff = layers[0]["w1"].shape[1]

    if bt is None:
        bt = B                 # amortize weight DMA over the whole batch
    assert B % bt == 0

    # Fused QKV weight/bias: one matmul per layer instead of three.
    wqkv = jnp.stack([jnp.concatenate([lp["wq"], lp["wk"], lp["wv"]], axis=1)
                      for lp in layers]).astype(jnp.bfloat16)    # (L, D, 3D)
    bqkv = jnp.stack([jnp.concatenate([lp["bq"], lp["bk"], lp["bv"]], axis=1)
                      for lp in layers])                         # (L, 1, 3D)
    wo = jnp.stack([lp["wo"] for lp in layers]).astype(jnp.bfloat16)
    w1 = jnp.stack([lp["w1"] for lp in layers]).astype(jnp.bfloat16)
    w2 = jnp.stack([lp["w2"] for lp in layers]).astype(jnp.bfloat16)
    b1 = jnp.stack([lp["b1"] for lp in layers])                  # (L, 1, dff)
    # Consolidated small per-layer params: [a1, g1, a2, g2, bo, b2] -> (L,6,D)
    small = jnp.stack([jnp.concatenate(
        [lp["a1"], lp["g1"], lp["a2"], lp["g2"], lp["bo"], lp["b2"]], axis=0)
        for lp in layers])
    fnorm = jnp.concatenate([params["norm_alpha"], params["norm_bias"]],
                            axis=0)                              # (2, D)

    # Additive mask bias precomputed once (0 where attend, -1e9 where masked).
    mask_bias = jnp.where(mask.reshape(B, 1, S) == 0.0, -1e9, 0.0
                          ).astype(jnp.float32)

    xspec = pl.BlockSpec((bt, S, D), lambda b, l: (b, 0, 0))
    mspec = pl.BlockSpec((bt, 1, S), lambda b, l: (b, 0, 0))

    def lspec(*dims):  # per-layer stacked param: select slab l
        return pl.BlockSpec((1,) + dims, lambda b, l: (l,) + (0,) * len(dims))

    fspec = pl.BlockSpec((2, D), lambda b, l: (0, 0))

    in_specs = [
        xspec, mspec,
        lspec(D, 3 * D), lspec(1, 3 * D),   # fused Wqkv, bqkv
        lspec(D, D),                        # Wo
        lspec(D, dff), lspec(1, dff),       # W1, b1
        lspec(dff, D),                      # W2
        lspec(6, D),                        # a1,g1,a2,g2,bo,b2
        fspec,                              # final norm alpha, bias
    ]

    return pl.pallas_call(
        functools.partial(encoder_kernel, num_heads=H, bt=bt, seq=S),
        out_shape=jax.ShapeDtypeStruct((B, S, D), jnp.float32),
        grid_spec=pltpu.PrefetchScalarGridSpec(
            num_scalar_prefetch=0, grid=(B // bt, L),
            in_specs=in_specs, out_specs=xspec,
            scratch_shapes=[pltpu.VMEM((bt * S, D), jnp.float32)]),
        compiler_params=pltpu.CompilerParams(
            dimension_semantics=("parallel", "arbitrary"),
            vmem_limit_bytes=48 * 1024 * 1024),
    )(x, mask_bias, wqkv, bqkv, wo, w1, b1, w2, small, fnorm)


# ----------------------------- reference -----------------------------------

def encoder_reference(x, mask, params):
    """Pure-JAX f32 reference matching the torch forward pass."""
    H = params["num_heads"]
    B, S, D = x.shape
    dk = D // H
    m = mask.reshape(B, 1, 1, S)
    for lp in params["layers"]:
        xn = _layer_norm(x, lp["a1"], lp["g1"])
        q = (xn @ lp["wq"] + lp["bq"]).reshape(B, S, H, dk).transpose(0, 2, 1, 3)
        k = (xn @ lp["wk"] + lp["bk"]).reshape(B, S, H, dk).transpose(0, 2, 1, 3)
        v = (xn @ lp["wv"] + lp["bv"]).reshape(B, S, H, dk).transpose(0, 2, 1, 3)
        scores = jnp.einsum("bhqd,bhkd->bhqk", q, k) / jnp.sqrt(jnp.float32(dk))
        scores = jnp.where(m == 0.0, -1e9, scores)
        p = jax.nn.softmax(scores, axis=-1)
        attn = jnp.einsum("bhqk,bhkd->bhqd", p, v).transpose(0, 2, 1, 3).reshape(B, S, D)
        x = x + (attn @ lp["wo"] + lp["bo"])
        xn2 = _layer_norm(x, lp["a2"], lp["g2"])
        ff = jnp.maximum(xn2 @ lp["w1"] + lp["b1"], 0.0) @ lp["w2"] + lp["b2"]
        x = x + ff
    return _layer_norm(x, params["norm_alpha"], params["norm_bias"])


def init_params(key, num_layers, D, dff, num_heads):
    layers = []
    keys = jax.random.split(key, num_layers)
    for lk in keys:
        ks = jax.random.split(lk, 12)
        s = 0.1
        layers.append(dict(
            wq=jax.random.normal(ks[0], (D, D), jnp.float32) * s,
            bq=jax.random.normal(ks[1], (1, D), jnp.float32) * s,
            wk=jax.random.normal(ks[2], (D, D), jnp.float32) * s,
            bk=jax.random.normal(ks[3], (1, D), jnp.float32) * s,
            wv=jax.random.normal(ks[4], (D, D), jnp.float32) * s,
            bv=jax.random.normal(ks[5], (1, D), jnp.float32) * s,
            wo=jax.random.normal(ks[6], (D, D), jnp.float32) * s,
            bo=jax.random.normal(ks[7], (1, D), jnp.float32) * s,
            w1=jax.random.normal(ks[8], (D, dff), jnp.float32) * s,
            b1=jax.random.normal(ks[9], (1, dff), jnp.float32) * s,
            w2=jax.random.normal(ks[10], (dff, D), jnp.float32) * s,
            b2=jax.random.normal(ks[11], (1, D), jnp.float32) * s,
            a1=jnp.ones((1, D), jnp.float32),
            g1=jnp.zeros((1, D), jnp.float32),
            a2=jnp.ones((1, D), jnp.float32),
            g2=jnp.zeros((1, D), jnp.float32),
        ))
    return dict(layers=layers, num_heads=num_heads,
                norm_alpha=jnp.ones((1, D), jnp.float32),
                norm_bias=jnp.zeros((1, D), jnp.float32))


if __name__ == "__main__":
    B, S, D, H, DFF, L = 2, 8, 32, 4, 64, 2
    key = jax.random.PRNGKey(0)
    kx, kp = jax.random.split(key, 2)

    x = jax.random.normal(kx, (B, S, D), jnp.float32)
    # padding-style mask: batch 0 fully valid, batch 1 has 3 masked positions
    lens = jnp.array([S, S - 3])
    mask = (jnp.arange(S)[None, :] < lens[:, None]).astype(jnp.float32)  # (B, S)

    params = init_params(kp, L, D, DFF, H)

    out = encoder_forward(x, mask, params)
    out = jax.block_until_ready(out)

    ref = encoder_reference(x, mask, params)
    assert out.shape == (B, S, D)
    # Tolerance accounts for bf16 MXU inputs + approx softmax reciprocal in the
    # kernel vs the pure-f32 reference (precision contract, not a bug).
    np.testing.assert_allclose(np.asarray(out), np.asarray(ref),
                               atol=5e-2, rtol=5e-2)
    print("KERNEL_OK")
</pallas_src>

<mosaic_0001>
module attributes {stable_mosaic.version = 11 : i64} {
  func.func @encoder_kernel(%arg0: i32, %arg1: i32, %arg2: memref<2x8x32xf32, #tpu.memory_space<vmem>>, %arg3: memref<2x1x8xf32, #tpu.memory_space<vmem>>, %arg4: memref<1x32x96xbf16, #tpu.memory_space<vmem>>, %arg5: memref<1x1x96xf32, #tpu.memory_space<vmem>>, %arg6: memref<1x32x32xbf16, #tpu.memory_space<vmem>>, %arg7: memref<1x32x64xbf16, #tpu.memory_space<vmem>>, %arg8: memref<1x1x64xf32, #tpu.memory_space<vmem>>, %arg9: memref<1x64x32xbf16, #tpu.memory_space<vmem>>, %arg10: memref<1x6x32xf32, #tpu.memory_space<vmem>>, %arg11: memref<2x32xf32, #tpu.memory_space<vmem>>, %arg12: memref<2x8x32xf32, #tpu.memory_space<vmem>>, %arg13: memref<16x32xf32, #tpu.memory_space<vmem>>) attributes {dimension_semantics = [#tpu.dimension_semantics<parallel>, #tpu.dimension_semantics<arbitrary>], iteration_bounds = array<i64: 1, 2>, scalar_prefetch = 0 : i64, scratch_operands = 1 : i64, tpu.core_type = #tpu.core_type<tc>, window_params = [{transform_indices = @transform_0, window_bounds = array<i64: 2, 8, 32>}, {transform_indices = @transform_1, window_bounds = array<i64: 2, 1, 8>}, {transform_indices = @transform_2, window_bounds = array<i64: 1, 32, 96>}, {transform_indices = @transform_3, window_bounds = array<i64: 1, 1, 96>}, {transform_indices = @transform_4, window_bounds = array<i64: 1, 32, 32>}, {transform_indices = @transform_5, window_bounds = array<i64: 1, 32, 64>}, {transform_indices = @transform_6, window_bounds = array<i64: 1, 1, 64>}, {transform_indices = @transform_7, window_bounds = array<i64: 1, 64, 32>}, {transform_indices = @transform_8, window_bounds = array<i64: 1, 6, 32>}, {pipeline_mode = #tpu.pipeline_mode<synchronous>, transform_indices = @transform_9, window_bounds = array<i64: 2, 32>}, {transform_indices = @transform_10, window_bounds = array<i64: 2, 8, 32>}]} {
    %c0_i32 = arith.constant 0 : i32
    %0 = arith.cmpi eq, %arg1, %c0_i32 : i32
    %1 = arith.extui %0 : i1 to i32
    %c0_i32_0 = arith.constant 0 : i32
    %2 = arith.cmpi ne, %1, %c0_i32_0 : i32
    scf.if %2 {
      %c0_94 = arith.constant 0 : index
      %c0_95 = arith.constant 0 : index
      %c0_96 = arith.constant 0 : index
      %290 = vector.load %arg2[%c0_94, %c0_95, %c0_96] : memref<2x8x32xf32, #tpu.memory_space<vmem>>, vector<1x8x32xf32>
      %291 = vector.shape_cast %290 : vector<1x8x32xf32> to vector<8x32xf32>
      %c0_97 = arith.constant 0 : index
      %c0_98 = arith.constant 0 : index
      %292 = vector.load %arg13[%c0_97, %c0_98] : memref<16x32xf32, #tpu.memory_space<vmem>>, vector<8x32xf32>
      tpu.vector_store %arg13[%c0_97, %c0_98], %291 {strides = array<i32>} : memref<16x32xf32, #tpu.memory_space<vmem>>, vector<8x32xf32>,
      %c1_99 = arith.constant 1 : index
      %c0_100 = arith.constant 0 : index
      %c0_101 = arith.constant 0 : index
      %293 = vector.load %arg2[%c1_99, %c0_100, %c0_101] : memref<2x8x32xf32, #tpu.memory_space<vmem>>, vector<1x8x32xf32>
      %294 = vector.shape_cast %293 : vector<1x8x32xf32> to vector<8x32xf32>
      %c8 = arith.constant 8 : index
      %c0_102 = arith.constant 0 : index
      %295 = vector.load %arg13[%c8, %c0_102] : memref<16x32xf32, #tpu.memory_space<vmem>>, vector<8x32xf32>
      tpu.vector_store %arg13[%c8, %c0_102], %294 {strides = array<i32>} : memref<16x32xf32, #tpu.memory_space<vmem>>, vector<8x32xf32>,
    } else {
    }
    %c0 = arith.constant 0 : index
    %c0_1 = arith.constant 0 : index
    %3 = vector.load %arg13[%c0, %c0_1] : memref<16x32xf32, #tpu.memory_space<vmem>>, vector<16x32xf32>
    %c0_2 = arith.constant 0 : index
    %c0_3 = arith.constant 0 : index
    %c0_4 = arith.constant 0 : index
    %4 = vector.load %arg10[%c0_2, %c0_3, %c0_4] : memref<1x6x32xf32, #tpu.memory_space<vmem>>, vector<1x6x32xf32>
    %5 = vector.shape_cast %4 : vector<1x6x32xf32> to vector<6x32xf32>
    %6 = vector.extract_strided_slice %5 {offsets = [0, 0], sizes = [1, 32], strides = [1, 1]} : vector<6x32xf32> to vector<1x32xf32>
    %7 = vector.extract_strided_slice %5 {offsets = [1, 0], sizes = [1, 32], strides = [1, 1]} : vector<6x32xf32> to vector<1x32xf32>
    %8 = vector.extract_strided_slice %5 {offsets = [2, 0], sizes = [1, 32], strides = [1, 1]} : vector<6x32xf32> to vector<1x32xf32>
    %9 = vector.extract_strided_slice %5 {offsets = [3, 0], sizes = [1, 32], strides = [1, 1]} : vector<6x32xf32> to vector<1x32xf32>
    %10 = vector.extract_strided_slice %5 {offsets = [4, 0], sizes = [1, 32], strides = [1, 1]} : vector<6x32xf32> to vector<1x32xf32>
    %11 = vector.extract_strided_slice %5 {offsets = [5, 0], sizes = [1, 32], strides = [1, 1]} : vector<6x32xf32> to vector<1x32xf32>
    %cst = arith.constant dense<0.000000e+00> : vector<16xf32>
    %12 = vector.multi_reduction <add>, %3, %cst [1] : vector<16x32xf32> to vector<16xf32>
    %13 = vector.shape_cast %12 : vector<16xf32> to vector<16x1xf32>
    %cst_5 = arith.constant 3.200000e+01 : f32
    %14 = vector.broadcast %cst_5 : f32 to vector<16x1xf32>
    %15 = arith.divf %13, %14 : vector<16x1xf32>
    %16 = vector.broadcast %15 : vector<16x1xf32> to vector<16x32xf32>
    %17 = arith.subf %3, %16 : vector<16x32xf32>
    %18 = arith.mulf %17, %17 : vector<16x32xf32>
    %cst_6 = arith.constant dense<0.000000e+00> : vector<16xf32>
    %19 = vector.multi_reduction <add>, %18, %cst_6 [1] : vector<16x32xf32> to vector<16xf32>
    %20 = vector.shape_cast %19 : vector<16xf32> to vector<16x1xf32>
    %cst_7 = arith.constant 3.100000e+01 : f32
    %21 = vector.broadcast %cst_7 : f32 to vector<16x1xf32>
    %22 = arith.divf %20, %21 : vector<16x1xf32>
    %23 = math.sqrt %22 : vector<16x1xf32>
    %24 = vector.broadcast %15 : vector<16x1xf32> to vector<16x32xf32>
    %25 = arith.subf %3, %24 : vector<16x32xf32>
    %26 = vector.broadcast %6 : vector<1x32xf32> to vector<16x32xf32>
    %27 = arith.mulf %26, %25 : vector<16x32xf32>
    %cst_8 = arith.constant 9.99999997E-7 : f32
    %28 = vector.broadcast %cst_8 : f32 to vector<16x1xf32>
    %29 = arith.addf %23, %28 : vector<16x1xf32>
    %30 = vector.broadcast %29 : vector<16x1xf32> to vector<16x32xf32>
    %31 = arith.divf %27, %30 : vector<16x32xf32>
    %32 = vector.broadcast %7 : vector<1x32xf32> to vector<16x32xf32>
    %33 = arith.addf %31, %32 : vector<16x32xf32>
    %34 = arith.truncf %33 : vector<16x32xf32> to vector<16x32xbf16>
    %c0_9 = arith.constant 0 : index
    %c0_10 = arith.constant 0 : index
    %c0_11 = arith.constant 0 : index
    %35 = vector.load %arg4[%c0_9, %c0_10, %c0_11] : memref<1x32x96xbf16, #tpu.memory_space<vmem>>, vector<1x32x96xbf16>
    %36 = vector.shape_cast %35 : vector<1x32x96xbf16> to vector<32x96xbf16>
    %cst_12 = arith.constant dense<0.000000e+00> : vector<16x96xf32>
    %37 = tpu.matmul %34, %36, %cst_12 {dimension_numbers = #tpu.dot_dimension_numbers<[1], [0], [0], [1], [0, 0, 1, 1], [], []>} : vector<16x32xbf16>, vector<32x96xbf16>, vector<16x96xf32> -> vector<16x96xf32>
    %c0_13 = arith.constant 0 : index
    %c0_14 = arith.constant 0 : index
    %c0_15 = arith.constant 0 : index
    %38 = vector.load %arg5[%c0_13, %c0_14, %c0_15] : memref<1x1x96xf32, #tpu.memory_space<vmem>>, vector<1x1x96xf32>
    %39 = vector.shape_cast %38 : vector<1x1x96xf32> to vector<1x96xf32>
    %40 = vector.broadcast %39 : vector<1x96xf32> to vector<16x96xf32>
    %41 = arith.addf %37, %40 : vector<16x96xf32>
    %42 = arith.truncf %41 : vector<16x96xf32> to vector<16x96xbf16>
    %c0_16 = arith.constant 0 : index
    %c0_17 = arith.constant 0 : index
    %c0_18 = arith.constant 0 : index
    %43 = vector.load %arg6[%c0_16, %c0_17, %c0_18] : memref<1x32x32xbf16, #tpu.memory_space<vmem>>, vector<1x32x32xbf16>
    %44 = vector.shape_cast %43 : vector<1x32x32xbf16> to vector<32x32xbf16>
    %c0_19 = arith.constant 0 : index
    %c0_20 = arith.constant 0 : index
    %c0_21 = arith.constant 0 : index
    %45 = vector.load %arg3[%c0_19, %c0_20, %c0_21] : memref<2x1x8xf32, #tpu.memory_space<vmem>>, vector<1x1x8xf32>
    %46 = vector.shape_cast %45 : vector<1x1x8xf32> to vector<1x8xf32>
    %cst_22 = arith.constant 0.000000e+00 : f32
    %47 = vector.broadcast %cst_22 : f32 to vector<8x32xf32>
    %48 = vector.extract_strided_slice %42 {offsets = [0, 0], sizes = [8, 8], strides = [1, 1]} : vector<16x96xbf16> to vector<8x8xbf16>
    %49 = vector.extract_strided_slice %42 {offsets = [0, 32], sizes = [8, 8], strides = [1, 1]} : vector<16x96xbf16> to vector<8x8xbf16>
    %50 = vector.extract_strided_slice %42 {offsets = [0, 64], sizes = [8, 8], strides = [1, 1]} : vector<16x96xbf16> to vector<8x8xbf16>
    %cst_23 = arith.constant dense<0.000000e+00> : vector<8x8xf32>
    %51 = tpu.matmul %48, %49, %cst_23 {dimension_numbers = #tpu.dot_dimension_numbers<[1], [1], [0], [0], [0, 0, 1, 0], [], []>} : vector<8x8xbf16>, vector<8x8xbf16>, vector<8x8xf32> -> vector<8x8xf32>
    %cst_24 = arith.constant 0.353553385 : f32
    %52 = vector.broadcast %cst_24 : f32 to vector<8x8xf32>
    %53 = arith.mulf %51, %52 : vector<8x8xf32>
    %54 = vector.broadcast %46 : vector<1x8xf32> to vector<8x8xf32>
    %55 = arith.addf %53, %54 : vector<8x8xf32>
    %cst_25 = arith.constant dense<0xFF800000> : vector<8xf32>
    %56 = vector.multi_reduction <maximumf>, %55, %cst_25 [1] : vector<8x8xf32> to vector<8xf32>
    %57 = vector.shape_cast %56 : vector<8xf32> to vector<8x1xf32>
    %58 = vector.broadcast %57 : vector<8x1xf32> to vector<8x8xf32>
    %59 = arith.subf %55, %58 : vector<8x8xf32>
    %60 = math.exp %59 : vector<8x8xf32>
    %cst_26 = arith.constant dense<0.000000e+00> : vector<8xf32>
    %61 = vector.multi_reduction <add>, %60, %cst_26 [1] : vector<8x8xf32> to vector<8xf32>
    %62 = vector.shape_cast %61 : vector<8xf32> to vector<8x1xf32>
    %63 = tpu.reciprocal %62 {approx = true} : vector<8x1xf32> -> vector<8x1xf32>
    %64 = vector.broadcast %63 : vector<8x1xf32> to vector<8x8xf32>
    %65 = arith.mulf %60, %64 : vector<8x8xf32>
    %66 = arith.truncf %65 : vector<8x8xf32> to vector<8x8xbf16>
    %cst_27 = arith.constant dense<0.000000e+00> : vector<8x8xf32>
    %67 = tpu.matmul %66, %50, %cst_27 {dimension_numbers = #tpu.dot_dimension_numbers<[1], [0], [0], [1], [0, 0, 1, 1], [], []>} : vector<8x8xbf16>, vector<8x8xbf16>, vector<8x8xf32> -> vector<8x8xf32>
    %68 = arith.truncf %67 : vector<8x8xf32> to vector<8x8xbf16>
    %69 = vector.extract_strided_slice %44 {offsets = [0, 0], sizes = [8, 32], strides = [1, 1]} : vector<32x32xbf16> to vector<8x32xbf16>
    %cst_28 = arith.constant dense<0.000000e+00> : vector<8x32xf32>
    %70 = tpu.matmul %68, %69, %cst_28 {dimension_numbers = #tpu.dot_dimension_numbers<[1], [0], [0], [1], [0, 0, 1, 1], [], []>} : vector<8x8xbf16>, vector<8x32xbf16>, vector<8x32xf32> -> vector<8x32xf32>
    %71 = arith.addf %47, %70 : vector<8x32xf32>
    %72 = vector.extract_strided_slice %42 {offsets = [0, 8], sizes = [8, 8], strides = [1, 1]} : vector<16x96xbf16> to vector<8x8xbf16>
    %73 = vector.extract_strided_slice %42 {offsets = [0, 40], sizes = [8, 8], strides = [1, 1]} : vector<16x96xbf16> to vector<8x8xbf16>
    %74 = vector.extract_strided_slice %42 {offsets = [0, 72], sizes = [8, 8], strides = [1, 1]} : vector<16x96xbf16> to vector<8x8xbf16>
    %cst_29 = arith.constant dense<0.000000e+00> : vector<8x8xf32>
    %75 = tpu.matmul %72, %73, %cst_29 {dimension_numbers = #tpu.dot_dimension_numbers<[1], [1], [0], [0], [0, 0, 1, 0], [], []>} : vector<8x8xbf16>, vector<8x8xbf16>, vector<8x8xf32> -> vector<8x8xf32>
    %cst_30 = arith.constant 0.353553385 : f32
    %76 = vector.broadcast %cst_30 : f32 to vector<8x8xf32>
    %77 = arith.mulf %75, %76 : vector<8x8xf32>
    %78 = vector.broadcast %46 : vector<1x8xf32> to vector<8x8xf32>
    %79 = arith.addf %77, %78 : vector<8x8xf32>
    %cst_31 = arith.constant dense<0xFF800000> : vector<8xf32>
    %80 = vector.multi_reduction <maximumf>, %79, %cst_31 [1] : vector<8x8xf32> to vector<8xf32>
    %81 = vector.shape_cast %80 : vector<8xf32> to vector<8x1xf32>
    %82 = vector.broadcast %81 : vector<8x1xf32> to vector<8x8xf32>
    %83 = arith.subf %79, %82 : vector<8x8xf32>
    %84 = math.exp %83 : vector<8x8xf32>
    %cst_32 = arith.constant dense<0.000000e+00> : vector<8xf32>
    %85 = vector.multi_reduction <add>, %84, %cst_32 [1] : vector<8x8xf32> to vector<8xf32>
    %86 = vector.shape_cast %85 : vector<8xf32> to vector<8x1xf32>
    %87 = tpu.reciprocal %86 {approx = true} : vector<8x1xf32> -> vector<8x1xf32>
    %88 = vector.broadcast %87 : vector<8x1xf32> to vector<8x8xf32>
    %89 = arith.mulf %84, %88 : vector<8x8xf32>
    %90 = arith.truncf %89 : vector<8x8xf32> to vector<8x8xbf16>
    %cst_33 = arith.constant dense<0.000000e+00> : vector<8x8xf32>
    %91 = tpu.matmul %90, %74, %cst_33 {dimension_numbers = #tpu.dot_dimension_numbers<[1], [0], [0], [1], [0, 0, 1, 1], [], []>} : vector<8x8xbf16>, vector<8x8xbf16>, vector<8x8xf32> -> vector<8x8xf32>
    %92 = arith.truncf %91 : vector<8x8xf32> to vector<8x8xbf16>
    %93 = vector.extract_strided_slice %44 {offsets = [8, 0], sizes = [8, 32], strides = [1, 1]} : vector<32x32xbf16> to vector<8x32xbf16>
    %cst_34 = arith.constant dense<0.000000e+00> : vector<8x32xf32>
    %94 = tpu.matmul %92, %93, %cst_34 {dimension_numbers = #tpu.dot_dimension_numbers<[1], [0], [0], [1], [0, 0, 1, 1], [], []>} : vector<8x8xbf16>, vector<8x32xbf16>, vector<8x32xf32> -> vector<8x32xf32>
    %95 = arith.addf %71, %94 : vector<8x32xf32>
    %96 = vector.extract_strided_slice %42 {offsets = [0, 16], sizes = [8, 8], strides = [1, 1]} : vector<16x96xbf16> to vector<8x8xbf16>
    %97 = vector.extract_strided_slice %42 {offsets = [0, 48], sizes = [8, 8], strides = [1, 1]} : vector<16x96xbf16> to vector<8x8xbf16>
    %98 = vector.extract_strided_slice %42 {offsets = [0, 80], sizes = [8, 8], strides = [1, 1]} : vector<16x96xbf16> to vector<8x8xbf16>
    %cst_35 = arith.constant dense<0.000000e+00> : vector<8x8xf32>
    %99 = tpu.matmul %96, %97, %cst_35 {dimension_numbers = #tpu.dot_dimension_numbers<[1], [1], [0], [0], [0, 0, 1, 0], [], []>} : vector<8x8xbf16>, vector<8x8xbf16>, vector<8x8xf32> -> vector<8x8xf32>
    %cst_36 = arith.constant 0.353553385 : f32
    %100 = vector.broadcast %cst_36 : f32 to vector<8x8xf32>
    %101 = arith.mulf %99, %100 : vector<8x8xf32>
    %102 = vector.broadcast %46 : vector<1x8xf32> to vector<8x8xf32>
    %103 = arith.addf %101, %102 : vector<8x8xf32>
    %cst_37 = arith.constant dense<0xFF800000> : vector<8xf32>
    %104 = vector.multi_reduction <maximumf>, %103, %cst_37 [1] : vector<8x8xf32> to vector<8xf32>
    %105 = vector.shape_cast %104 : vector<8xf32> to vector<8x1xf32>
    %106 = vector.broadcast %105 : vector<8x1xf32> to vector<8x8xf32>
    %107 = arith.subf %103, %106 : vector<8x8xf32>
    %108 = math.exp %107 : vector<8x8xf32>
    %cst_38 = arith.constant dense<0.000000e+00> : vector<8xf32>
    %109 = vector.multi_reduction <add>, %108, %cst_38 [1] : vector<8x8xf32> to vector<8xf32>
    %110 = vector.shape_cast %109 : vector<8xf32> to vector<8x1xf32>
    %111 = tpu.reciprocal %110 {approx = true} : vector<8x1xf32> -> vector<8x1xf32>
    %112 = vector.broadcast %111 : vector<8x1xf32> to vector<8x8xf32>
    %113 = arith.mulf %108, %112 : vector<8x8xf32>
    %114 = arith.truncf %113 : vector<8x8xf32> to vector<8x8xbf16>
    %cst_39 = arith.constant dense<0.000000e+00> : vector<8x8xf32>
    %115 = tpu.matmul %114, %98, %cst_39 {dimension_numbers = #tpu.dot_dimension_numbers<[1], [0], [0], [1], [0, 0, 1, 1], [], []>} : vector<8x8xbf16>, vector<8x8xbf16>, vector<8x8xf32> -> vector<8x8xf32>
    %116 = arith.truncf %115 : vector<8x8xf32> to vector<8x8xbf16>
    %117 = vector.extract_strided_slice %44 {offsets = [16, 0], sizes = [8, 32], strides = [1, 1]} : vector<32x32xbf16> to vector<8x32xbf16>
    %cst_40 = arith.constant dense<0.000000e+00> : vector<8x32xf32>
    %118 = tpu.matmul %116, %117, %cst_40 {dimension_numbers = #tpu.dot_dimension_numbers<[1], [0], [0], [1], [0, 0, 1, 1], [], []>} : vector<8x8xbf16>, vector<8x32xbf16>, vector<8x32xf32> -> vector<8x32xf32>
    %119 = arith.addf %95, %118 : vector<8x32xf32>
    %120 = vector.extract_strided_slice %42 {offsets = [0, 24], sizes = [8, 8], strides = [1, 1]} : vector<16x96xbf16> to vector<8x8xbf16>
    %121 = vector.extract_strided_slice %42 {offsets = [0, 56], sizes = [8, 8], strides = [1, 1]} : vector<16x96xbf16> to vector<8x8xbf16>
    %122 = vector.extract_strided_slice %42 {offsets = [0, 88], sizes = [8, 8], strides = [1, 1]} : vector<16x96xbf16> to vector<8x8xbf16>
    %cst_41 = arith.constant dense<0.000000e+00> : vector<8x8xf32>
    %123 = tpu.matmul %120, %121, %cst_41 {dimension_numbers = #tpu.dot_dimension_numbers<[1], [1], [0], [0], [0, 0, 1, 0], [], []>} : vector<8x8xbf16>, vector<8x8xbf16>, vector<8x8xf32> -> vector<8x8xf32>
    %cst_42 = arith.constant 0.353553385 : f32
    %124 = vector.broadcast %cst_42 : f32 to vector<8x8xf32>
    %125 = arith.mulf %123, %124 : vector<8x8xf32>
    %126 = vector.broadcast %46 : vector<1x8xf32> to vector<8x8xf32>
    %127 = arith.addf %125, %126 : vector<8x8xf32>
    %cst_43 = arith.constant dense<0xFF800000> : vector<8xf32>
    %128 = vector.multi_reduction <maximumf>, %127, %cst_43 [1] : vector<8x8xf32> to vector<8xf32>
    %129 = vector.shape_cast %128 : vector<8xf32> to vector<8x1xf32>
    %130 = vector.broadcast %129 : vector<8x1xf32> to vector<8x8xf32>
    %131 = arith.subf %127, %130 : vector<8x8xf32>
    %132 = math.exp %131 : vector<8x8xf32>
    %cst_44 = arith.constant dense<0.000000e+00> : vector<8xf32>
    %133 = vector.multi_reduction <add>, %132, %cst_44 [1] : vector<8x8xf32> to vector<8xf32>
    %134 = vector.shape_cast %133 : vector<8xf32> to vector<8x1xf32>
    %135 = tpu.reciprocal %134 {approx = true} : vector<8x1xf32> -> vector<8x1xf32>
    %136 = vector.broadcast %135 : vector<8x1xf32> to vector<8x8xf32>
    %137 = arith.mulf %132, %136 : vector<8x8xf32>
    %138 = arith.truncf %137 : vector<8x8xf32> to vector<8x8xbf16>
    %cst_45 = arith.constant dense<0.000000e+00> : vector<8x8xf32>
    %139 = tpu.matmul %138, %122, %cst_45 {dimension_numbers = #tpu.dot_dimension_numbers<[1], [0], [0], [1], [0, 0, 1, 1], [], []>} : vector<8x8xbf16>, vector<8x8xbf16>, vector<8x8xf32> -> vector<8x8xf32>
    %140 = arith.truncf %139 : vector<8x8xf32> to vector<8x8xbf16>
    %141 = vector.extract_strided_slice %44 {offsets = [24, 0], sizes = [8, 32], strides = [1, 1]} : vector<32x32xbf16> to vector<8x32xbf16>
    %cst_46 = arith.constant dense<0.000000e+00> : vector<8x32xf32>
    %142 = tpu.matmul %140, %141, %cst_46 {dimension_numbers = #tpu.dot_dimension_numbers<[1], [0], [0], [1], [0, 0, 1, 1], [], []>} : vector<8x8xbf16>, vector<8x32xbf16>, vector<8x32xf32> -> vector<8x32xf32>
    %143 = arith.addf %119, %142 : vector<8x32xf32>
    %c1 = arith.constant 1 : index
    %c0_47 = arith.constant 0 : index
    %c0_48 = arith.constant 0 : index
    %144 = vector.load %arg3[%c1, %c0_47, %c0_48] : memref<2x1x8xf32, #tpu.memory_space<vmem>>, vector<1x1x8xf32>
    %145 = vector.shape_cast %144 : vector<1x1x8xf32> to vector<1x8xf32>
    %cst_49 = arith.constant 0.000000e+00 : f32
    %146 = vector.broadcast %cst_49 : f32 to vector<8x32xf32>
    %147 = vector.extract_strided_slice %42 {offsets = [8, 0], sizes = [8, 8], strides = [1, 1]} : vector<16x96xbf16> to vector<8x8xbf16>
    %148 = vector.extract_strided_slice %42 {offsets = [8, 32], sizes = [8, 8], strides = [1, 1]} : vector<16x96xbf16> to vector<8x8xbf16>
    %149 = vector.extract_strided_slice %42 {offsets = [8, 64], sizes = [8, 8], strides = [1, 1]} : vector<16x96xbf16> to vector<8x8xbf16>
    %cst_50 = arith.constant dense<0.000000e+00> : vector<8x8xf32>
    %150 = tpu.matmul %147, %148, %cst_50 {dimension_numbers = #tpu.dot_dimension_numbers<[1], [1], [0], [0], [0, 0, 1, 0], [], []>} : vector<8x8xbf16>, vector<8x8xbf16>, vector<8x8xf32> -> vector<8x8xf32>
    %cst_51 = arith.constant 0.353553385 : f32
    %151 = vector.broadcast %cst_51 : f32 to vector<8x8xf32>
    %152 = arith.mulf %150, %151 : vector<8x8xf32>
    %153 = vector.broadcast %145 : vector<1x8xf32> to vector<8x8xf32>
    %154 = arith.addf %152, %153 : vector<8x8xf32>
    %cst_52 = arith.constant dense<0xFF800000> : vector<8xf32>
    %155 = vector.multi_reduction <maximumf>, %154, %cst_52 [1] : vector<8x8xf32> to vector<8xf32>
    %156 = vector.shape_cast %155 : vector<8xf32> to vector<8x1xf32>
    %157 = vector.broadcast %156 : vector<8x1xf32> to vector<8x8xf32>
    %158 = arith.subf %154, %157 : vector<8x8xf32>
    %159 = math.exp %158 : vector<8x8xf32>
    %cst_53 = arith.constant dense<0.000000e+00> : vector<8xf32>
    %160 = vector.multi_reduction <add>, %159, %cst_53 [1] : vector<8x8xf32> to vector<8xf32>
    %161 = vector.shape_cast %160 : vector<8xf32> to vector<8x1xf32>
    %162 = tpu.reciprocal %161 {approx = true} : vector<8x1xf32> -> vector<8x1xf32>
    %163 = vector.broadcast %162 : vector<8x1xf32> to vector<8x8xf32>
    %164 = arith.mulf %159, %163 : vector<8x8xf32>
    %165 = arith.truncf %164 : vector<8x8xf32> to vector<8x8xbf16>
    %cst_54 = arith.constant dense<0.000000e+00> : vector<8x8xf32>
    %166 = tpu.matmul %165, %149, %cst_54 {dimension_numbers = #tpu.dot_dimension_numbers<[1], [0], [0], [1], [0, 0, 1, 1], [], []>} : vector<8x8xbf16>, vector<8x8xbf16>, vector<8x8xf32> -> vector<8x8xf32>
    %167 = arith.truncf %166 : vector<8x8xf32> to vector<8x8xbf16>
    %168 = vector.extract_strided_slice %44 {offsets = [0, 0], sizes = [8, 32], strides = [1, 1]} : vector<32x32xbf16> to vector<8x32xbf16>
    %cst_55 = arith.constant dense<0.000000e+00> : vector<8x32xf32>
    %169 = tpu.matmul %167, %168, %cst_55 {dimension_numbers = #tpu.dot_dimension_numbers<[1], [0], [0], [1], [0, 0, 1, 1], [], []>} : vector<8x8xbf16>, vector<8x32xbf16>, vector<8x32xf32> -> vector<8x32xf32>
    %170 = arith.addf %146, %169 : vector<8x32xf32>
    %171 = vector.extract_strided_slice %42 {offsets = [8, 8], sizes = [8, 8], strides = [1, 1]} : vector<16x96xbf16> to vector<8x8xbf16>
    %172 = vector.extract_strided_slice %42 {offsets = [8, 40], sizes = [8, 8], strides = [1, 1]} : vector<16x96xbf16> to vector<8x8xbf16>
    %173 = vector.extract_strided_slice %42 {offsets = [8, 72], sizes = [8, 8], strides = [1, 1]} : vector<16x96xbf16> to vector<8x8xbf16>
    %cst_56 = arith.constant dense<0.000000e+00> : vector<8x8xf32>
    %174 = tpu.matmul %171, %172, %cst_56 {dimension_numbers = #tpu.dot_dimension_numbers<[1], [1], [0], [0], [0, 0, 1, 0], [], []>} : vector<8x8xbf16>, vector<8x8xbf16>, vector<8x8xf32> -> vector<8x8xf32>
    %cst_57 = arith.constant 0.353553385 : f32
    %175 = vector.broadcast %cst_57 : f32 to vector<8x8xf32>
    %176 = arith.mulf %174, %175 : vector<8x8xf32>
    %177 = vector.broadcast %145 : vector<1x8xf32> to vector<8x8xf32>
    %178 = arith.addf %176, %177 : vector<8x8xf32>
    %cst_58 = arith.constant dense<0xFF800000> : vector<8xf32>
    %179 = vector.multi_reduction <maximumf>, %178, %cst_58 [1] : vector<8x8xf32> to vector<8xf32>
    %180 = vector.shape_cast %179 : vector<8xf32> to vector<8x1xf32>
    %181 = vector.broadcast %180 : vector<8x1xf32> to vector<8x8xf32>
    %182 = arith.subf %178, %181 : vector<8x8xf32>
    %183 = math.exp %182 : vector<8x8xf32>
    %cst_59 = arith.constant dense<0.000000e+00> : vector<8xf32>
    %184 = vector.multi_reduction <add>, %183, %cst_59 [1] : vector<8x8xf32> to vector<8xf32>
    %185 = vector.shape_cast %184 : vector<8xf32> to vector<8x1xf32>
    %186 = tpu.reciprocal %185 {approx = true} : vector<8x1xf32> -> vector<8x1xf32>
    %187 = vector.broadcast %186 : vector<8x1xf32> to vector<8x8xf32>
    %188 = arith.mulf %183, %187 : vector<8x8xf32>
    %189 = arith.truncf %188 : vector<8x8xf32> to vector<8x8xbf16>
    %cst_60 = arith.constant dense<0.000000e+00> : vector<8x8xf32>
    %190 = tpu.matmul %189, %173, %cst_60 {dimension_numbers = #tpu.dot_dimension_numbers<[1], [0], [0], [1], [0, 0, 1, 1], [], []>} : vector<8x8xbf16>, vector<8x8xbf16>, vector<8x8xf32> -> vector<8x8xf32>
    %191 = arith.truncf %190 : vector<8x8xf32> to vector<8x8xbf16>
    %192 = vector.extract_strided_slice %44 {offsets = [8, 0], sizes = [8, 32], strides = [1, 1]} : vector<32x32xbf16> to vector<8x32xbf16>
    %cst_61 = arith.constant dense<0.000000e+00> : vector<8x32xf32>
    %193 = tpu.matmul %191, %192, %cst_61 {dimension_numbers = #tpu.dot_dimension_numbers<[1], [0], [0], [1], [0, 0, 1, 1], [], []>} : vector<8x8xbf16>, vector<8x32xbf16>, vector<8x32xf32> -> vector<8x32xf32>
    %194 = arith.addf %170, %193 : vector<8x32xf32>
    %195 = vector.extract_strided_slice %42 {offsets = [8, 16], sizes = [8, 8], strides = [1, 1]} : vector<16x96xbf16> to vector<8x8xbf16>
    %196 = vector.extract_strided_slice %42 {offsets = [8, 48], sizes = [8, 8], strides = [1, 1]} : vector<16x96xbf16> to vector<8x8xbf16>
    %197 = vector.extract_strided_slice %42 {offsets = [8, 80], sizes = [8, 8], strides = [1, 1]} : vector<16x96xbf16> to vector<8x8xbf16>
    %cst_62 = arith.constant dense<0.000000e+00> : vector<8x8xf32>
    %198 = tpu.matmul %195, %196, %cst_62 {dimension_numbers = #tpu.dot_dimension_numbers<[1], [1], [0], [0], [0, 0, 1, 0], [], []>} : vector<8x8xbf16>, vector<8x8xbf16>, vector<8x8xf32> -> vector<8x8xf32>
    %cst_63 = arith.constant 0.353553385 : f32
    %199 = vector.broadcast %cst_63 : f32 to vector<8x8xf32>
    %200 = arith.mulf %198, %199 : vector<8x8xf32>
    %201 = vector.broadcast %145 : vector<1x8xf32> to vector<8x8xf32>
    %202 = arith.addf %200, %201 : vector<8x8xf32>
    %cst_64 = arith.constant dense<0xFF800000> : vector<8xf32>
    %203 = vector.multi_reduction <maximumf>, %202, %cst_64 [1] : vector<8x8xf32> to vector<8xf32>
    %204 = vector.shape_cast %203 : vector<8xf32> to vector<8x1xf32>
    %205 = vector.broadcast %204 : vector<8x1xf32> to vector<8x8xf32>
    %206 = arith.subf %202, %205 : vector<8x8xf32>
    %207 = math.exp %206 : vector<8x8xf32>
    %cst_65 = arith.constant dense<0.000000e+00> : vector<8xf32>
    %208 = vector.multi_reduction <add>, %207, %cst_65 [1] : vector<8x8xf32> to vector<8xf32>
    %209 = vector.shape_cast %208 : vector<8xf32> to vector<8x1xf32>
    %210 = tpu.reciprocal %209 {approx = true} : vector<8x1xf32> -> vector<8x1xf32>
    %211 = vector.broadcast %210 : vector<8x1xf32> to vector<8x8xf32>
    %212 = arith.mulf %207, %211 : vector<8x8xf32>
    %213 = arith.truncf %212 : vector<8x8xf32> to vector<8x8xbf16>
    %cst_66 = arith.constant dense<0.000000e+00> : vector<8x8xf32>
    %214 = tpu.matmul %213, %197, %cst_66 {dimension_numbers = #tpu.dot_dimension_numbers<[1], [0], [0], [1], [0, 0, 1, 1], [], []>} : vector<8x8xbf16>, vector<8x8xbf16>, vector<8x8xf32> -> vector<8x8xf32>
    %215 = arith.truncf %214 : vector<8x8xf32> to vector<8x8xbf16>
    %216 = vector.extract_strided_slice %44 {offsets = [16, 0], sizes = [8, 32], strides = [1, 1]} : vector<32x32xbf16> to vector<8x32xbf16>
    %cst_67 = arith.constant dense<0.000000e+00> : vector<8x32xf32>
    %217 = tpu.matmul %215, %216, %cst_67 {dimension_numbers = #tpu.dot_dimension_numbers<[1], [0], [0], [1], [0, 0, 1, 1], [], []>} : vector<8x8xbf16>, vector<8x32xbf16>, vector<8x32xf32> -> vector<8x32xf32>
    %218 = arith.addf %194, %217 : vector<8x32xf32>
    %219 = vector.extract_strided_slice %42 {offsets = [8, 24], sizes = [8, 8], strides = [1, 1]} : vector<16x96xbf16> to vector<8x8xbf16>
    %220 = vector.extract_strided_slice %42 {offsets = [8, 56], sizes = [8, 8], strides = [1, 1]} : vector<16x96xbf16> to vector<8x8xbf16>
    %221 = vector.extract_strided_slice %42 {offsets = [8, 88], sizes = [8, 8], strides = [1, 1]} : vector<16x96xbf16> to vector<8x8xbf16>
    %cst_68 = arith.constant dense<0.000000e+00> : vector<8x8xf32>
    %222 = tpu.matmul %219, %220, %cst_68 {dimension_numbers = #tpu.dot_dimension_numbers<[1], [1], [0], [0], [0, 0, 1, 0], [], []>} : vector<8x8xbf16>, vector<8x8xbf16>, vector<8x8xf32> -> vector<8x8xf32>
    %cst_69 = arith.constant 0.353553385 : f32
    %223 = vector.broadcast %cst_69 : f32 to vector<8x8xf32>
    %224 = arith.mulf %222, %223 : vector<8x8xf32>
    %225 = vector.broadcast %145 : vector<1x8xf32> to vector<8x8xf32>
    %226 = arith.addf %224, %225 : vector<8x8xf32>
    %cst_70 = arith.constant dense<0xFF800000> : vector<8xf32>
    %227 = vector.multi_reduction <maximumf>, %226, %cst_70 [1] : vector<8x8xf32> to vector<8xf32>
    %228 = vector.shape_cast %227 : vector<8xf32> to vector<8x1xf32>
    %229 = vector.broadcast %228 : vector<8x1xf32> to vector<8x8xf32>
    %230 = arith.subf %226, %229 : vector<8x8xf32>
    %231 = math.exp %230 : vector<8x8xf32>
    %cst_71 = arith.constant dense<0.000000e+00> : vector<8xf32>
    %232 = vector.multi_reduction <add>, %231, %cst_71 [1] : vector<8x8xf32> to vector<8xf32>
    %233 = vector.shape_cast %232 : vector<8xf32> to vector<8x1xf32>
    %234 = tpu.reciprocal %233 {approx = true} : vector<8x1xf32> -> vector<8x1xf32>
    %235 = vector.broadcast %234 : vector<8x1xf32> to vector<8x8xf32>
    %236 = arith.mulf %231, %235 : vector<8x8xf32>
    %237 = arith.truncf %236 : vector<8x8xf32> to vector<8x8xbf16>
    %cst_72 = arith.constant dense<0.000000e+00> : vector<8x8xf32>
    %238 = tpu.matmul %237, %221, %cst_72 {dimension_numbers = #tpu.dot_dimension_numbers<[1], [0], [0], [1], [0, 0, 1, 1], [], []>} : vector<8x8xbf16>, vector<8x8xbf16>, vector<8x8xf32> -> vector<8x8xf32>
    %239 = arith.truncf %238 : vector<8x8xf32> to vector<8x8xbf16>
    %240 = vector.extract_strided_slice %44 {offsets = [24, 0], sizes = [8, 32], strides = [1, 1]} : vector<32x32xbf16> to vector<8x32xbf16>
    %cst_73 = arith.constant dense<0.000000e+00> : vector<8x32xf32>
    %241 = tpu.matmul %239, %240, %cst_73 {dimension_numbers = #tpu.dot_dimension_numbers<[1], [0], [0], [1], [0, 0, 1, 1], [], []>} : vector<8x8xbf16>, vector<8x32xbf16>, vector<8x32xf32> -> vector<8x32xf32>
    %242 = arith.addf %218, %241 : vector<8x32xf32>
    %243 = tpu.concatenate %143, %242 in 0 : vector<8x32xf32>, vector<8x32xf32> -> vector<16x32xf32>
    %244 = arith.addf %3, %243 : vector<16x32xf32>
    %245 = vector.broadcast %10 : vector<1x32xf32> to vector<16x32xf32>
    %246 = arith.addf %244, %245 : vector<16x32xf32>
    %cst_74 = arith.constant dense<0.000000e+00> : vector<16xf32>
    %247 = vector.multi_reduction <add>, %246, %cst_74 [1] : vector<16x32xf32> to vector<16xf32>
    %248 = vector.shape_cast %247 : vector<16xf32> to vector<16x1xf32>
    %cst_75 = arith.constant 3.200000e+01 : f32
    %249 = vector.broadcast %cst_75 : f32 to vector<16x1xf32>
    %250 = arith.divf %248, %249 : vector<16x1xf32>
    %251 = vector.broadcast %250 : vector<16x1xf32> to vector<16x32xf32>
    %252 = arith.subf %246, %251 : vector<16x32xf32>
    %253 = arith.mulf %252, %252 : vector<16x32xf32>
    %cst_76 = arith.constant dense<0.000000e+00> : vector<16xf32>
    %254 = vector.multi_reduction <add>, %253, %cst_76 [1] : vector<16x32xf32> to vector<16xf32>
    %255 = vector.shape_cast %254 : vector<16xf32> to vector<16x1xf32>
    %cst_77 = arith.constant 3.100000e+01 : f32
    %256 = vector.broadcast %cst_77 : f32 to vector<16x1xf32>
    %257 = arith.divf %255, %256 : vector<16x1xf32>
    %258 = math.sqrt %257 : vector<16x1xf32>
    %259 = vector.broadcast %250 : vector<16x1xf32> to vector<16x32xf32>
    %260 = arith.subf %246, %259 : vector<16x32xf32>
    %261 = vector.broadcast %8 : vector<1x32xf32> to vector<16x32xf32>
    %262 = arith.mulf %261, %260 : vector<16x32xf32>
    %cst_78 = arith.constant 9.99999997E-7 : f32
    %263 = vector.broadcast %cst_78 : f32 to vector<16x1xf32>
    %264 = arith.addf %258, %263 : vector<16x1xf32>
    %265 = vector.broadcast %264 : vector<16x1xf32> to vector<16x32xf32>
    %266 = arith.divf %262, %265 : vector<16x32xf32>
    %267 = vector.broadcast %9 : vector<1x32xf32> to vector<16x32xf32>
    %268 = arith.addf %266, %267 : vector<16x32xf32>
    %269 = arith.truncf %268 : vector<16x32xf32> to vector<16x32xbf16>
    %c0_79 = arith.constant 0 : index
    %c0_80 = arith.constant 0 : index
    %c0_81 = arith.constant 0 : index
    %270 = vector.load %arg7[%c0_79, %c0_80, %c0_81] : memref<1x32x64xbf16, #tpu.memory_space<vmem>>, vector<1x32x64xbf16>
    %271 = vector.shape_cast %270 : vector<1x32x64xbf16> to vector<32x64xbf16>
    %cst_82 = arith.constant dense<0.000000e+00> : vector<16x64xf32>
    %272 = tpu.matmul %269, %271, %cst_82 {dimension_numbers = #tpu.dot_dimension_numbers<[1], [0], [0], [1], [0, 0, 1, 1], [], []>} : vector<16x32xbf16>, vector<32x64xbf16>, vector<16x64xf32> -> vector<16x64xf32>
    %c0_83 = arith.constant 0 : index
    %c0_84 = arith.constant 0 : index
    %c0_85 = arith.constant 0 : index
    %273 = vector.load %arg8[%c0_83, %c0_84, %c0_85] : memref<1x1x64xf32, #tpu.memory_space<vmem>>, vector<1x1x64xf32>
    %274 = vector.shape_cast %273 : vector<1x1x64xf32> to vector<1x64xf32>
    %275 = vector.broadcast %274 : vector<1x64xf32> to vector<16x64xf32>
    %276 = arith.addf %272, %275 : vector<16x64xf32>
    %cst_86 = arith.constant 0.000000e+00 : f32
    %277 = vector.broadcast %cst_86 : f32 to vector<16x64xf32>
    %278 = arith.maximumf %276, %277 : vector<16x64xf32>
    %279 = arith.truncf %278 : vector<16x64xf32> to vector<16x64xbf16>
    %c0_87 = arith.constant 0 : index
    %c0_88 = arith.constant 0 : index
    %c0_89 = arith.constant 0 : index
    %280 = vector.load %arg9[%c0_87, %c0_88, %c0_89] : memref<1x64x32xbf16, #tpu.memory_space<vmem>>, vector<1x64x32xbf16>
    %281 = vector.shape_cast %280 : vector<1x64x32xbf16> to vector<64x32xbf16>
    %cst_90 = arith.constant dense<0.000000e+00> : vector<16x32xf32>
    %282 = tpu.matmul %279, %281, %cst_90 {dimension_numbers = #tpu.dot_dimension_numbers<[1], [0], [0], [1], [0, 0, 1, 1], [], []>} : vector<16x64xbf16>, vector<64x32xbf16>, vector<16x32xf32> -> vector<16x32xf32>
    %283 = vector.broadcast %11 : vector<1x32xf32> to vector<16x32xf32>
    %284 = arith.addf %282, %283 : vector<16x32xf32>
    %285 = arith.addf %246, %284 : vector<16x32xf32>
    %c0_91 = arith.constant 0 : index
    %c0_92 = arith.constant 0 : index
    %286 = vector.load %arg13[%c0_91, %c0_92] : memref<16x32xf32, #tpu.memory_space<vmem>>, vector<16x32xf32>
    tpu.vector_store %arg13[%c0_91, %c0_92], %285 {strides = array<i32>} : memref<16x32xf32, #tpu.memory_space<vmem>>, vector<16x32xf32>,
    %c1_i32 = arith.constant 1 : i32
    %287 = arith.cmpi eq, %arg1, %c1_i32 : i32
    %288 = arith.extui %287 : i1 to i32
    %c0_i32_93 = arith.constant 0 : i32
    %289 = arith.cmpi ne, %288, %c0_i32_93 : i32
    scf.if %289 {
      %c0_94 = arith.constant 0 : index
      %c0_95 = arith.constant 0 : index
      %290 = vector.load %arg11[%c0_94, %c0_95] : memref<2x32xf32, #tpu.memory_space<vmem>>, vector<1x32xf32>
      %c1_96 = arith.constant 1 : index
      %c0_97 = arith.constant 0 : index
      %291 = vector.load %arg11[%c1_96, %c0_97] : memref<2x32xf32, #tpu.memory_space<vmem>>, vector<1x32xf32>
      %cst_98 = arith.constant dense<0.000000e+00> : vector<16xf32>
      %292 = vector.multi_reduction <add>, %285, %cst_98 [1] : vector<16x32xf32> to vector<16xf32>
      %293 = vector.shape_cast %292 : vector<16xf32> to vector<16x1xf32>
      %cst_99 = arith.constant 3.200000e+01 : f32
      %294 = vector.broadcast %cst_99 : f32 to vector<16x1xf32>
      %295 = arith.divf %293, %294 : vector<16x1xf32>
      %296 = vector.broadcast %295 : vector<16x1xf32> to vector<16x32xf32>
      %297 = arith.subf %285, %296 : vector<16x32xf32>
      %298 = arith.mulf %297, %297 : vector<16x32xf32>
      %cst_100 = arith.constant dense<0.000000e+00> : vector<16xf32>
      %299 = vector.multi_reduction <add>, %298, %cst_100 [1] : vector<16x32xf32> to vector<16xf32>
      %300 = vector.shape_cast %299 : vector<16xf32> to vector<16x1xf32>
      %cst_101 = arith.constant 3.100000e+01 : f32
      %301 = vector.broadcast %cst_101 : f32 to vector<16x1xf32>
      %302 = arith.divf %300, %301 : vector<16x1xf32>
      %303 = math.sqrt %302 : vector<16x1xf32>
      %304 = vector.broadcast %295 : vector<16x1xf32> to vector<16x32xf32>
      %305 = arith.subf %285, %304 : vector<16x32xf32>
      %306 = vector.broadcast %290 : vector<1x32xf32> to vector<16x32xf32>
      %307 = arith.mulf %306, %305 : vector<16x32xf32>
      %cst_102 = arith.constant 9.99999997E-7 : f32
      %308 = vector.broadcast %cst_102 : f32 to vector<16x1xf32>
      %309 = arith.addf %303, %308 : vector<16x1xf32>
      %310 = vector.broadcast %309 : vector<16x1xf32> to vector<16x32xf32>
      %311 = arith.divf %307, %310 : vector<16x32xf32>
      %312 = vector.broadcast %291 : vector<1x32xf32> to vector<16x32xf32>
      %313 = arith.addf %311, %312 : vector<16x32xf32>
      %314 = vector.extract_strided_slice %313 {offsets = [0, 0], sizes = [8, 32], strides = [1, 1]} : vector<16x32xf32> to vector<8x32xf32>
      %c0_103 = arith.constant 0 : index
      %c0_104 = arith.constant 0 : index
      %c0_105 = arith.constant 0 : index
      %315 = vector.load %arg12[%c0_103, %c0_104, %c0_105] : memref<2x8x32xf32, #tpu.memory_space<vmem>>, vector<1x8x32xf32>
      %316 = vector.shape_cast %315 : vector<1x8x32xf32> to vector<8x32xf32>
      %317 = vector.shape_cast %314 : vector<8x32xf32> to vector<1x8x32xf32>
      tpu.vector_store %arg12[%c0_103, %c0_104, %c0_105], %317 {strides = array<i32>} : memref<2x8x32xf32, #tpu.memory_space<vmem>>, vector<1x8x32xf32>,
      %318 = vector.extract_strided_slice %313 {offsets = [8, 0], sizes = [8, 32], strides = [1, 1]} : vector<16x32xf32> to vector<8x32xf32>
      %c1_106 = arith.constant 1 : index
      %c0_107 = arith.constant 0 : index
      %c0_108 = arith.constant 0 : index
      %319 = vector.load %arg12[%c1_106, %c0_107, %c0_108] : memref<2x8x32xf32, #tpu.memory_space<vmem>>, vector<1x8x32xf32>
      %320 = vector.shape_cast %319 : vector<1x8x32xf32> to vector<8x32xf32>
      %321 = vector.shape_cast %318 : vector<8x32xf32> to vector<1x8x32xf32>
      tpu.vector_store %arg12[%c1_106, %c0_107, %c0_108], %321 {strides = array<i32>} : memref<2x8x32xf32, #tpu.memory_space<vmem>>, vector<1x8x32xf32>,
    } else {
    }
    return
  }
  func.func @transform_0(%arg0: i32, %arg1: i32) -> (i32, i32, i32) {
    %c0_i32 = arith.constant 0 : i32
    %c0_i32_0 = arith.constant 0 : i32
    %c0_i32_1 = arith.constant 0 : i32
    return %arg0, %c0_i32, %c0_i32_0 : i32, i32, i32
  }
  func.func @transform_1(%arg0: i32, %arg1: i32) -> (i32, i32, i32) {
    %c0_i32 = arith.constant 0 : i32
    %c0_i32_0 = arith.constant 0 : i32
    %c0_i32_1 = arith.constant 0 : i32
    return %arg0, %c0_i32, %c0_i32_0 : i32, i32, i32
  }
  func.func @transform_2(%arg0: i32, %arg1: i32) -> (i32, i32, i32) {
    %c0_i32 = arith.constant 0 : i32
    %c0_i32_0 = arith.constant 0 : i32
    %c0_i32_1 = arith.constant 0 : i32
    return %arg1, %c0_i32, %c0_i32_0 : i32, i32, i32
  }
  func.func @transform_3(%arg0: i32, %arg1: i32) -> (i32, i32, i32) {
    %c0_i32 = arith.constant 0 : i32
    %c0_i32_0 = arith.constant 0 : i32
    %c0_i32_1 = arith.constant 0 : i32
    return %arg1, %c0_i32, %c0_i32_0 : i32, i32, i32
  }
  func.func @transform_4(%arg0: i32, %arg1: i32) -> (i32, i32, i32) {
    %c0_i32 = arith.constant 0 : i32
    %c0_i32_0 = arith.constant 0 : i32
    %c0_i32_1 = arith.constant 0 : i32
    return %arg1, %c0_i32, %c0_i32_0 : i32, i32, i32
  }
  func.func @transform_5(%arg0: i32, %arg1: i32) -> (i32, i32, i32) {
    %c0_i32 = arith.constant 0 : i32
    %c0_i32_0 = arith.constant 0 : i32
    %c0_i32_1 = arith.constant 0 : i32
    return %arg1, %c0_i32, %c0_i32_0 : i32, i32, i32
  }
  func.func @transform_6(%arg0: i32, %arg1: i32) -> (i32, i32, i32) {
    %c0_i32 = arith.constant 0 : i32
    %c0_i32_0 = arith.constant 0 : i32
    %c0_i32_1 = arith.constant 0 : i32
    return %arg1, %c0_i32, %c0_i32_0 : i32, i32, i32
  }
  func.func @transform_7(%arg0: i32, %arg1: i32) -> (i32, i32, i32) {
    %c0_i32 = arith.constant 0 : i32
    %c0_i32_0 = arith.constant 0 : i32
    %c0_i32_1 = arith.constant 0 : i32
    return %arg1, %c0_i32, %c0_i32_0 : i32, i32, i32
  }
  func.func @transform_8(%arg0: i32, %arg1: i32) -> (i32, i32, i32) {
    %c0_i32 = arith.constant 0 : i32
    %c0_i32_0 = arith.constant 0 : i32
    %c0_i32_1 = arith.constant 0 : i32
    return %arg1, %c0_i32, %c0_i32_0 : i32, i32, i32
  }
  func.func @transform_9(%arg0: i32, %arg1: i32) -> (i32, i32) {
    %c0_i32 = arith.constant 0 : i32
    %c0_i32_0 = arith.constant 0 : i32
    %c0_i32_1 = arith.constant 0 : i32
    return %c0_i32, %c0_i32_0 : i32, i32
  }
  func.func @transform_10(%arg0: i32, %arg1: i32) -> (i32, i32, i32) {
    %c0_i32 = arith.constant 0 : i32
    %c0_i32_0 = arith.constant 0 : i32
    %c0_i32_1 = arith.constant 0 : i32
    return %arg0, %c0_i32, %c0_i32_0 : i32, i32, i32
  }
}

</mosaic_0001>

<llo_original>
// kernel: tpu_custom_call.1
$region0: #{tpu_custom_call.1}
  #allocation0 [shape = 'u32[]', space=smem, size = 0x4, offset = 0x4, fixed_abs, tag = 'smem constant byte address 0x4 - core index']
  #allocation1 [shape = 'u32[144,128]{1,0:T(1,128)}', space=vmem, size = 0x12000, scoped, tag = 'internal scratch']
  #allocation2 [shape = 'f32[16,32]{1,0:T(8,128)}', space=vmem, size = 0x2000, scoped, tag = 'scratch operand']
  %s0 = inlined_call_operand.vmem [shape: f32[2,8,32], index: 0, kind: input, shape index: {}]
  %s1 = inlined_call_operand.vmem [shape: f32[2,1,8], index: 1, kind: input, shape index: {}]
  %s2 = inlined_call_operand.vmem [shape: bf16[2,32,96], index: 2, kind: input, shape index: {}]
  %s3 = inlined_call_operand.vmem [shape: f32[2,1,96], index: 3, kind: input, shape index: {}]
  %s4 = inlined_call_operand.vmem [shape: bf16[2,32,32], index: 4, kind: input, shape index: {}]
  %s5 = inlined_call_operand.vmem [shape: bf16[2,32,64], index: 5, kind: input, shape index: {}]
  %s6 = inlined_call_operand.vmem [shape: f32[2,1,64], index: 6, kind: input, shape index: {}]
  %s7 = inlined_call_operand.vmem [shape: bf16[2,64,32], index: 7, kind: input, shape index: {}]
  %s8 = inlined_call_operand.vmem [shape: f32[2,6,32], index: 8, kind: input, shape index: {}]
  %s9 = inlined_call_operand.vmem [shape: f32[2,32], index: 9, kind: input, shape index: {}]
  %s10 = inlined_call_operand.hbm [shape: f32[2,8,32], index: 10, kind: output, shape index: {}]
  %s11 = sld [smem:[#allocation0]]
  $region81: #{tpu_custom_call.1} parent=0
    _
  %s13 = ssub.s32 1, %s11
  %s14 = scalar_select 0, %s13, %s11
  $region1: #{tpu_custom_call.1} parent=0
    #allocation3 [shape = 'u8[8192]{0}', space=vmem, size = 0x2000, scoped, tag = 'output window, operand 0, single buffered']
    #allocation4 [shape = 's32[2]{0}', space=sflag, size = 0x8, scoped, tag = 'scoped memory for tpu_custom_call.1']
    %15 = vsyncpa [#allocation4], 0
    loop: start=0, step=1, limit=4
    $region2: #{tpu_custom_call.1} parent=1 // loop_pre_header
      _
    $region3: #{tpu_custom_call.1} parent=1 // loop_header
      %s17 = sphi 0, %s21
      %p18 = scmp.ge.s32.totalorder %s17, 4
      %s24 = sphi 0, %s36
      %s25 = sphi 0, %s32
      %s26 = sphi 0, %s24
      %s27 = sphi 0, %s25
      %s28 = sphi 0, %s26
      %s29 = sphi 0, %s27
      %s39 = sphi 0, %s41
      %s42 = sphi 0, %s39
      %s43 = sphi 0, %s42
      %s59 = sphi 0, %s43
      %s65 = sphi 0, %s67
      %s68 = sphi 0, %s65
      %s69 = sphi 0, %s68
      %s85 = sphi 0, %s69
      %s91 = sphi 0, %s93
      %s94 = sphi 0, %s91
      %s95 = sphi 0, %s94
      %s111 = sphi 0, %s95
      %s117 = sphi 0, %s119
      %s120 = sphi 0, %s117
      %s121 = sphi 0, %s120
      %s137 = sphi 0, %s121
      %s143 = sphi 0, %s145
      %s146 = sphi 0, %s143
      %s147 = sphi 0, %s146
      %s163 = sphi 0, %s147
      %s169 = sphi 0, %s171
      %s172 = sphi 0, %s169
      %s173 = sphi 0, %s172
      %s189 = sphi 0, %s173
      %s195 = sphi 0, %s197
      %s198 = sphi 0, %s195
      %s199 = sphi 0, %s198
      %s215 = sphi 0, %s199
      %s221 = sphi 0, %s223
      %s224 = sphi 0, %s221
      %s225 = sphi 0, %s224
      %s241 = sphi 0, %s225
      %s247 = sphi 0, %s249
      %s250 = sphi 0, %s247
      %s251 = sphi 0, %s250
      %s267 = sphi 0, %s251
      %s271 = sphi 0, %s271
      %s273 = sphi 0, %s271
      %s274 = sphi 0, %s273
      %s288 = sphi 0, %s274
      %s294 = sphi 0, %s296
      %s297 = sphi 0, %s294
      %s298 = sphi 0, %s297
      %s314 = sphi 0, %s298
    $region4: #{tpu_custom_call.1} parent=1 // loop_header_branch
      %20 = sbr.rel (%p18) target = $region8
    $region5: #{tpu_custom_call.1} parent=1 // loop_body
      %s22 = ssub.s32 %s17, 1
      %s23 = ssub.s32 %s17, 2
      %s30 = sadd.s32 1, %s25
      %p31 = scmp.ge.s32.totalorder %s30, 2
      %s32 = scalar_select %p31, 0, %s30
      %s33 = sadd.s32 1, %s24
      %s34 = scalar_select %p31, %s33, %s24
      %p35 = scmp.ge.s32.totalorder %s34, 1
      %s36 = scalar_select %p35, 0, %s34
      %s37 = ssub.s32 %s24, %s36
      %p38 = scmp.eq.s32.totalorder %s37, 0
      %s40 = sadd.s32 %s39, 1
      %s41 = scalar_select %p38, %s39, %s40
      %p44 = pneg %p38
      %p45 = scmp.eq.s32.totalorder %s17, 1
      %p46 = por %p44, %p45
      %p47 = scmp.ne.s32.totalorder %s39, %s42
      %p48 = scmp.eq.s32.totalorder %s17, 0
      %p49 = por %p47, %p48
      %p50 = scmp.ne.s32.totalorder %s39, %s42
      %p51 = scmp.eq.s32.totalorder %s22, 1
      %p52 = por %p50, %p51
      %p53 = scmp.ne.s32.totalorder %s42, %s43
      %p54 = scmp.eq.s32.totalorder %s22, 0
      %p55 = por %p53, %p54
      %p56 = scmp.ne.s32.totalorder %s42, %s43
      %p57 = scmp.eq.s32.totalorder %s23, 1
      %p58 = por %p56, %p57
      %p60 = scmp.ne.s32.totalorder %s43, %s59
      %p61 = scmp.eq.s32.totalorder %s23, 0
      %p62 = por %p60, %p61
      %s63 = ssub.s32 %s24, %s36
      %p64 = scmp.eq.s32.totalorder %s63, 0
      %s66 = sadd.s32 %s65, 1
      %s67 = scalar_select %p64, %s65, %s66
      %p70 = pneg %p64
      %p71 = scmp.eq.s32.totalorder %s17, 1
      %p72 = por %p70, %p71
      %p73 = scmp.ne.s32.totalorder %s65, %s68
      %p74 = scmp.eq.s32.totalorder %s17, 0
      %p75 = por %p73, %p74
      %p76 = scmp.ne.s32.totalorder %s65, %s68
      %p77 = scmp.eq.s32.totalorder %s22, 1
      %p78 = por %p76, %p77
      %p79 = scmp.ne.s32.totalorder %s68, %s69
      %p80 = scmp.eq.s32.totalorder %s22, 0
      %p81 = por %p79, %p80
      %p82 = scmp.ne.s32.totalorder %s68, %s69
      %p83 = scmp.eq.s32.totalorder %s23, 1
      %p84 = por %p82, %p83
      %p86 = scmp.ne.s32.totalorder %s69, %s85
      %p87 = scmp.eq.s32.totalorder %s23, 0
      %p88 = por %p86, %p87
      %s89 = ssub.s32 %s25, %s32
      %p90 = scmp.eq.s32.totalorder %s89, 0
      %s92 = sadd.s32 %s91, 1
      %s93 = scalar_select %p90, %s91, %s92
      %p96 = pneg %p90
      %p97 = scmp.eq.s32.totalorder %s17, 1
      %p98 = por %p96, %p97
      %p99 = scmp.ne.s32.totalorder %s91, %s94
      %p100 = scmp.eq.s32.totalorder %s17, 0
      %p101 = por %p99, %p100
      %p102 = scmp.ne.s32.totalorder %s91, %s94
      %p103 = scmp.eq.s32.totalorder %s22, 1
      %p104 = por %p102, %p103
      %p105 = scmp.ne.s32.totalorder %s94, %s95
      %p106 = scmp.eq.s32.totalorder %s22, 0
      %p107 = por %p105, %p106
      %p108 = scmp.ne.s32.totalorder %s94, %s95
      %p109 = scmp.eq.s32.totalorder %s23, 1
      %p110 = por %p108, %p109
      %p112 = scmp.ne.s32.totalorder %s95, %s111
      %p113 = scmp.eq.s32.totalorder %s23, 0
      %p114 = por %p112, %p113
      %s115 = ssub.s32 %s25, %s32
      %p116 = scmp.eq.s32.totalorder %s115, 0
      %s118 = sadd.s32 %s117, 1
      %s119 = scalar_select %p116, %s117, %s118
      %p122 = pneg %p116
      %p123 = scmp.eq.s32.totalorder %s17, 1
      %p124 = por %p122, %p123
      %p125 = scmp.ne.s32.totalorder %s117, %s120
      %p126 = scmp.eq.s32.totalorder %s17, 0
      %p127 = por %p125, %p126
      %p128 = scmp.ne.s32.totalorder %s117, %s120
      %p129 = scmp.eq.s32.totalorder %s22, 1
      %p130 = por %p128, %p129
      %p131 = scmp.ne.s32.totalorder %s120, %s121
      %p132 = scmp.eq.s32.totalorder %s22, 0
      %p133 = por %p131, %p132
      %p134 = scmp.ne.s32.totalorder %s120, %s121
      %p135 = scmp.eq.s32.totalorder %s23, 1
      %p136 = por %p134, %p135
      %p138 = scmp.ne.s32.totalorder %s121, %s137
      %p139 = scmp.eq.s32.totalorder %s23, 0
      %p140 = por %p138, %p139
      %s141 = ssub.s32 %s25, %s32
      %p142 = scmp.eq.s32.totalorder %s141, 0
      %s144 = sadd.s32 %s143, 1
      %s145 = scalar_select %p142, %s143, %s144
      %p148 = pneg %p142
      %p149 = scmp.eq.s32.totalorder %s17, 1
      %p150 = por %p148, %p149
      %p151 = scmp.ne.s32.totalorder %s143, %s146
      %p152 = scmp.eq.s32.totalorder %s17, 0
      %p153 = por %p151, %p152
      %p154 = scmp.ne.s32.totalorder %s143, %s146
      %p155 = scmp.eq.s32.totalorder %s22, 1
      %p156 = por %p154, %p155
      %p157 = scmp.ne.s32.totalorder %s146, %s147
      %p158 = scmp.eq.s32.totalorder %s22, 0
      %p159 = por %p157, %p158
      %p160 = scmp.ne.s32.totalorder %s146, %s147
      %p161 = scmp.eq.s32.totalorder %s23, 1
      %p162 = por %p160, %p161
      %p164 = scmp.ne.s32.totalorder %s147, %s163
      %p165 = scmp.eq.s32.totalorder %s23, 0
      %p166 = por %p164, %p165
      %s167 = ssub.s32 %s25, %s32
      %p168 = scmp.eq.s32.totalorder %s167, 0
      %s170 = sadd.s32 %s169, 1
      %s171 = scalar_select %p168, %s169, %s170
      %p174 = pneg %p168
      %p175 = scmp.eq.s32.totalorder %s17, 1
      %p176 = por %p174, %p175
      %p177 = scmp.ne.s32.totalorder %s169, %s172
      %p178 = scmp.eq.s32.totalorder %s17, 0
      %p179 = por %p177, %p178
      %p180 = scmp.ne.s32.totalorder %s169, %s172
      %p181 = scmp.eq.s32.totalorder %s22, 1
      %p182 = por %p180, %p181
      %p183 = scmp.ne.s32.totalorder %s172, %s173
      %p184 = scmp.eq.s32.totalorder %s22, 0
      %p185 = por %p183, %p184
      %p186 = scmp.ne.s32.totalorder %s172, %s173
      %p187 = scmp.eq.s32.totalorder %s23, 1
      %p188 = por %p186, %p187
      %p190 = scmp.ne.s32.totalorder %s173, %s189
      %p191 = scmp.eq.s32.totalorder %s23, 0
      %p192 = por %p190, %p191
      %s193 = ssub.s32 %s25, %s32
      %p194 = scmp.eq.s32.totalorder %s193, 0
      %s196 = sadd.s32 %s195, 1
      %s197 = scalar_select %p194, %s195, %s196
      %p200 = pneg %p194
      %p201 = scmp.eq.s32.totalorder %s17, 1
      %p202 = por %p200, %p201
      %p203 = scmp.ne.s32.totalorder %s195, %s198
      %p204 = scmp.eq.s32.totalorder %s17, 0
      %p205 = por %p203, %p204
      %p206 = scmp.ne.s32.totalorder %s195, %s198
      %p207 = scmp.eq.s32.totalorder %s22, 1
      %p208 = por %p206, %p207
      %p209 = scmp.ne.s32.totalorder %s198, %s199
      %p210 = scmp.eq.s32.totalorder %s22, 0
      %p211 = por %p209, %p210
      %p212 = scmp.ne.s32.totalorder %s198, %s199
      %p213 = scmp.eq.s32.totalorder %s23, 1
      %p214 = por %p212, %p213
      %p216 = scmp.ne.s32.totalorder %s199, %s215
      %p217 = scmp.eq.s32.totalorder %s23, 0
      %p218 = por %p216, %p217
      %s219 = ssub.s32 %s25, %s32
      %p220 = scmp.eq.s32.totalorder %s219, 0
      %s222 = sadd.s32 %s221, 1
      %s223 = scalar_select %p220, %s221, %s222
      %p226 = pneg %p220
      %p227 = scmp.eq.s32.totalorder %s17, 1
      %p228 = por %p226, %p227
      %p229 = scmp.ne.s32.totalorder %s221, %s224
      %p230 = scmp.eq.s32.totalorder %s17, 0
      %p231 = por %p229, %p230
      %p232 = scmp.ne.s32.totalorder %s221, %s224
      %p233 = scmp.eq.s32.totalorder %s22, 1
      %p234 = por %p232, %p233
      %p235 = scmp.ne.s32.totalorder %s224, %s225
      %p236 = scmp.eq.s32.totalorder %s22, 0
      %p237 = por %p235, %p236
      %p238 = scmp.ne.s32.totalorder %s224, %s225
      %p239 = scmp.eq.s32.totalorder %s23, 1
      %p240 = por %p238, %p239
      %p242 = scmp.ne.s32.totalorder %s225, %s241
      %p243 = scmp.eq.s32.totalorder %s23, 0
      %p244 = por %p242, %p243
      %s245 = ssub.s32 %s25, %s32
      %p246 = scmp.eq.s32.totalorder %s245, 0
      %s248 = sadd.s32 %s247, 1
      %s249 = scalar_select %p246, %s247, %s248
      %p252 = pneg %p246
      %p253 = scmp.eq.s32.totalorder %s17, 1
      %p254 = por %p252, %p253
      %p255 = scmp.ne.s32.totalorder %s247, %s250
      %p256 = scmp.eq.s32.totalorder %s17, 0
      %p257 = por %p255, %p256
      %p258 = scmp.ne.s32.totalorder %s247, %s250
      %p259 = scmp.eq.s32.totalorder %s22, 1
      %p260 = por %p258, %p259
      %p261 = scmp.ne.s32.totalorder %s250, %s251
      %p262 = scmp.eq.s32.totalorder %s22, 0
      %p263 = por %p261, %p262
      %p264 = scmp.ne.s32.totalorder %s250, %s251
      %p265 = scmp.eq.s32.totalorder %s23, 1
      %p266 = por %p264, %p265
      %p268 = scmp.ne.s32.totalorder %s251, %s267
      %p269 = scmp.eq.s32.totalorder %s23, 0
      %p270 = por %p268, %p269
      %s272 = sadd.s32 %s271, 1
      %p275 = scmp.eq.s32.totalorder %s17, 1
      %p276 = scmp.ne.s32.totalorder %s271, %s273
      %p277 = scmp.eq.s32.totalorder %s17, 0
      %p278 = por %p276, %p277
      %p279 = scmp.ne.s32.totalorder %s271, %s273
      %p280 = scmp.eq.s32.totalorder %s22, 1
      %p281 = por %p279, %p280
      %p282 = scmp.ne.s32.totalorder %s273, %s274
      %p283 = scmp.eq.s32.totalorder %s22, 0
      %p284 = por %p282, %p283
      %p285 = scmp.ne.s32.totalorder %s273, %s274
      %p286 = scmp.eq.s32.totalorder %s23, 1
      %p287 = por %p285, %p286
      %p289 = scmp.ne.s32.totalorder %s274, %s288
      %p290 = scmp.eq.s32.totalorder %s23, 0
      %p291 = por %p289, %p290
      %s292 = ssub.s32 %s24, %s36
      %p293 = scmp.eq.s32.totalorder %s292, 0
      %s295 = sadd.s32 %s294, 1
      %s296 = scalar_select %p293, %s294, %s295
      %p299 = pneg %p293
      %p300 = scmp.eq.s32.totalorder %s17, 1
      %p301 = por %p299, %p300
      %p302 = scmp.ne.s32.totalorder %s294, %s297
      %p303 = scmp.eq.s32.totalorder %s17, 0
      %p304 = por %p302, %p303
      %p305 = scmp.ne.s32.totalorder %s294, %s297
      %p306 = scmp.eq.s32.totalorder %s22, 1
      %p307 = por %p305, %p306
      %p308 = scmp.ne.s32.totalorder %s297, %s298
      %p309 = scmp.eq.s32.totalorder %s22, 0
      %p310 = por %p308, %p309
      %p311 = scmp.ne.s32.totalorder %s297, %s298
      %p312 = scmp.eq.s32.totalorder %s23, 1
      %p313 = por %p311, %p312
      %p315 = scmp.ne.s32.totalorder %s298, %s314
      %p316 = scmp.eq.s32.totalorder %s23, 0
      %p317 = por %p315, %p316
      %p318 = scmp.le.s32.totalorder 1, %s17
      %p319 = scmp.lt.s32.totalorder %s17, 3
      %p320 = pnand %p318, %p319
      %p321 = pneg %p320
      // Predicated region
      $region9: #{tpu_custom_call.1} parent=5 // pred_check
        _
      $region10: #{tpu_custom_call.1} parent=5 // pred_check_branch
        %323 = sbr.rel (%p320) target = $region12
      $region11: #{tpu_custom_call.1} parent=5 // pred_region
        %s324 = ssub.s32 %s17, 1
        // Predicated region
        $region13: #{tpu_custom_call.1} parent=11 // pred_check
          %p325 = pneg %p55
        $region14: #{tpu_custom_call.1} parent=11 // pred_check_branch
          %327 = sbr.rel (%p325) target = $region16
        $region15: #{tpu_custom_call.1} parent=11 // pred_region
          %s328 = smul.u32 2, %s26
          %p329 = scmp.lt.s32.totalorder %s328, 1
          %s330 = scalar_select %p329, %s328, 1
          %s331 = smul.addr %s330, 8
          %s332 = scalar_lea.vmem %s0, %s331
          %s333 = smul.u32 2, %s26
        $region16: #{tpu_custom_call.1} parent=11 // pred_fallthru
          _
        // Predicated region
        $region17: #{tpu_custom_call.1} parent=11 // pred_check
          %p334 = pneg %p81
        $region18: #{tpu_custom_call.1} parent=11 // pred_check_branch
          %336 = sbr.rel (%p334) target = $region20
        $region19: #{tpu_custom_call.1} parent=11 // pred_region
          %s337 = smul.u32 2, %s26
          %p338 = scmp.lt.s32.totalorder %s337, 1
          %s339 = scalar_select %p338, %s337, 1
          %s340 = scalar_lea.vmem %s1, %s339
          %s341 = smul.u32 2, %s26
        $region20: #{tpu_custom_call.1} parent=11 // pred_fallthru
          _
        // Predicated region
        $region21: #{tpu_custom_call.1} parent=11 // pred_check
          %p342 = pneg %p284
        $region22: #{tpu_custom_call.1} parent=11 // pred_check_branch
          %344 = sbr.rel (%p342) target = $region24
        $region23: #{tpu_custom_call.1} parent=11 // pred_region
          _
        $region24: #{tpu_custom_call.1} parent=11 // pred_fallthru
          _
      $region12: #{tpu_custom_call.1} parent=5 // pred_fallthru
        _
      %p345 = scmp.lt.s32.totalorder %s17, 2
      // Predicated region
      $region25: #{tpu_custom_call.1} parent=5 // pred_check
        %p346 = pneg %p345
      $region26: #{tpu_custom_call.1} parent=5 // pred_check_branch
        %348 = sbr.rel (%p346) target = $region28
      $region27: #{tpu_custom_call.1} parent=5 // pred_region
        // Predicated region
        $region29: #{tpu_custom_call.1} parent=27 // pred_check
          %p349 = pneg %p101
        $region30: #{tpu_custom_call.1} parent=27 // pred_check_branch
          %351 = sbr.rel (%p349) target = $region32
        $region31: #{tpu_custom_call.1} parent=27 // pred_region
          %p352 = scmp.lt.s32.totalorder %s25, 1
          %s353 = scalar_select %p352, %s25, 1
          %s354 = smul.addr %s353, 4
          %s355 = smul.addr %s354, 4
          %s356 = scalar_lea.vmem %s2, %s355
        $region32: #{tpu_custom_call.1} parent=27 // pred_fallthru
          _
        // Predicated region
        $region33: #{tpu_custom_call.1} parent=27 // pred_check
          %p357 = pneg %p127
        $region34: #{tpu_custom_call.1} parent=27 // pred_check_branch
          %359 = sbr.rel (%p357) target = $region36
        $region35: #{tpu_custom_call.1} parent=27 // pred_region
          %p360 = scmp.lt.s32.totalorder %s25, 1
          %s361 = scalar_select %p360, %s25, 1
          %s362 = scalar_lea.vmem %s3, %s361
        $region36: #{tpu_custom_call.1} parent=27 // pred_fallthru
          _
        // Predicated region
        $region37: #{tpu_custom_call.1} parent=27 // pred_check
          %p363 = pneg %p153
        $region38: #{tpu_custom_call.1} parent=27 // pred_check_branch
          %365 = sbr.rel (%p363) target = $region40
        $region39: #{tpu_custom_call.1} parent=27 // pred_region
          %p366 = scmp.lt.s32.totalorder %s25, 1
          %s367 = scalar_select %p366, %s25, 1
          %s368 = smul.addr %s367, 4
          %s369 = smul.addr %s368, 4
          %s370 = scalar_lea.vmem %s4, %s369
        $region40: #{tpu_custom_call.1} parent=27 // pred_fallthru
          _
        // Predicated region
        $region41: #{tpu_custom_call.1} parent=27 // pred_check
          %p371 = pneg %p179
        $region42: #{tpu_custom_call.1} parent=27 // pred_check_branch
          %373 = sbr.rel (%p371) target = $region44
        $region43: #{tpu_custom_call.1} parent=27 // pred_region
          %p374 = scmp.lt.s32.totalorder %s25, 1
          %s375 = scalar_select %p374, %s25, 1
          %s376 = smul.addr %s375, 4
          %s377 = smul.addr %s376, 4
          %s378 = scalar_lea.vmem %s5, %s377
        $region44: #{tpu_custom_call.1} parent=27 // pred_fallthru
          _
        // Predicated region
        $region45: #{tpu_custom_call.1} parent=27 // pred_check
          %p379 = pneg %p205
        $region46: #{tpu_custom_call.1} parent=27 // pred_check_branch
          %381 = sbr.rel (%p379) target = $region48
        $region47: #{tpu_custom_call.1} parent=27 // pred_region
          %p382 = scmp.lt.s32.totalorder %s25, 1
          %s383 = scalar_select %p382, %s25, 1
          %s384 = scalar_lea.vmem %s6, %s383
        $region48: #{tpu_custom_call.1} parent=27 // pred_fallthru
          _
        // Predicated region
        $region49: #{tpu_custom_call.1} parent=27 // pred_check
          %p385 = pneg %p231
        $region50: #{tpu_custom_call.1} parent=27 // pred_check_branch
          %387 = sbr.rel (%p385) target = $region52
        $region51: #{tpu_custom_call.1} parent=27 // pred_region
          %p388 = scmp.lt.s32.totalorder %s25, 1
          %s389 = scalar_select %p388, %s25, 1
          %s390 = smul.addr %s389, 8
          %s391 = smul.addr %s390, 4
          %s392 = scalar_lea.vmem %s7, %s391
        $region52: #{tpu_custom_call.1} parent=27 // pred_fallthru
          _
        // Predicated region
        $region53: #{tpu_custom_call.1} parent=27 // pred_check
          %p393 = pneg %p257
        $region54: #{tpu_custom_call.1} parent=27 // pred_check_branch
          %395 = sbr.rel (%p393) target = $region56
        $region55: #{tpu_custom_call.1} parent=27 // pred_region
          %p396 = scmp.lt.s32.totalorder %s25, 1
          %s397 = scalar_select %p396, %s25, 1
          %s398 = smul.addr %s397, 8
          %s399 = scalar_lea.vmem %s8, %s398
        $region56: #{tpu_custom_call.1} parent=27 // pred_fallthru
          _
      $region28: #{tpu_custom_call.1} parent=5 // pred_fallthru
        _
      %p400 = scmp.le.s32.totalorder 1, %s17
      %p401 = scmp.lt.s32.totalorder %s17, 3
      %p402 = pnand %p400, %p401
      %p403 = pneg %p402
      // Predicated region
      $region57: #{tpu_custom_call.1} parent=5 // pred_check
        _
      $region58: #{tpu_custom_call.1} parent=5 // pred_check_branch
        %405 = sbr.rel (%p402) target = $region60
      $region59: #{tpu_custom_call.1} parent=5 // pred_region
        %s406 = ssub.s32 %s17, 1
        %s407 = smul.u32 2, %s26
        %p408 = scmp.lt.s32.totalorder %s407, 1
        %s409 = scalar_select %p408, %s407, 1
        %s410 = smul.addr %s409, 8
        %s411 = scalar_lea.vmem %s0, %s410
        %p412 = pneg %p55
        %p413 = pneg %p52
        %s414 = smul.u32 2, %s26
        %p415 = scmp.lt.s32.totalorder %s414, 1
        %s416 = scalar_select %p415, %s414, 1
        %s417 = scalar_lea.vmem %s1, %s416
        %p418 = pneg %p81
        %p419 = pneg %p78
        %p420 = scmp.lt.s32.totalorder %s27, 1
        %s421 = scalar_select %p420, %s27, 1
        %s422 = smul.addr %s421, 4
        %s423 = smul.addr %s422, 4
        %s424 = scalar_lea.vmem %s2, %s423
        %p425 = pneg %p107
        %p426 = pneg %p104
        %p427 = scmp.lt.s32.totalorder %s27, 1
        %s428 = scalar_select %p427, %s27, 1
        %s429 = scalar_lea.vmem %s3, %s428
        %p430 = pneg %p133
        %p431 = pneg %p130
        %p432 = scmp.lt.s32.totalorder %s27, 1
        %s433 = scalar_select %p432, %s27, 1
        %s434 = smul.addr %s433, 4
        %s435 = smul.addr %s434, 4
        %s436 = scalar_lea.vmem %s4, %s435
        %p437 = pneg %p159
        %p438 = pneg %p156
        %p439 = scmp.lt.s32.totalorder %s27, 1
        %s440 = scalar_select %p439, %s27, 1
        %s441 = smul.addr %s440, 4
        %s442 = smul.addr %s441, 4
        %s443 = scalar_lea.vmem %s5, %s442
        %p444 = pneg %p185
        %p445 = pneg %p182
        %p446 = scmp.lt.s32.totalorder %s27, 1
        %s447 = scalar_select %p446, %s27, 1
        %s448 = scalar_lea.vmem %s6, %s447
        %p449 = pneg %p211
        %p450 = pneg %p208
        %p451 = scmp.lt.s32.totalorder %s27, 1
        %s452 = scalar_select %p451, %s27, 1
        %s453 = smul.addr %s452, 8
        %s454 = smul.addr %s453, 4
        %s455 = scalar_lea.vmem %s7, %s454
        %p456 = pneg %p237
        %p457 = pneg %p234
        %p458 = scmp.lt.s32.totalorder %s27, 1
        %s459 = scalar_select %p458, %s27, 1
        %s460 = smul.addr %s459, 8
        %s461 = scalar_lea.vmem %s8, %s460
        %p462 = pneg %p263
        %p463 = pneg %p260
        %p464 = pneg %p284
        %p465 = pneg %p281
        %p466 = pneg %p310
        %p467 = pneg %p307
        %s468 = smul.u32 2, %s26
        %p469 = scmp.lt.s32.totalorder %s468, 1
        %s470 = scalar_select %p469, %s468, 1
        %s471 = smul.addr %s470, 8
        %s472 = scalar_lea.vmem %s0, %s471
        %s473 = smul.u32 2, %s26
        %s474 = smul.u32 2, %s26
        %p475 = scmp.lt.s32.totalorder %s474, 1
        %s476 = scalar_select %p475, %s474, 1
        %s477 = scalar_lea.vmem %s1, %s476
        %s478 = smul.u32 2, %s26
        %p479 = scmp.lt.s32.totalorder %s27, 1
        %s480 = scalar_select %p479, %s27, 1
        %s481 = smul.addr %s480, 4
        %s482 = smul.addr %s481, 4
        %s483 = scalar_lea.vmem %s2, %s482
        %p484 = scmp.lt.s32.totalorder %s27, 1
        %s485 = scalar_select %p484, %s27, 1
        %s486 = scalar_lea.vmem %s3, %s485
        %p487 = scmp.lt.s32.totalorder %s27, 1
        %s488 = scalar_select %p487, %s27, 1
        %s489 = smul.addr %s488, 4
        %s490 = smul.addr %s489, 4
        %s491 = scalar_lea.vmem %s4, %s490
        %p492 = scmp.lt.s32.totalorder %s27, 1
        %s493 = scalar_select %p492, %s27, 1
        %s494 = smul.addr %s493, 4
        %s495 = smul.addr %s494, 4
        %s496 = scalar_lea.vmem %s5, %s495
        %p497 = scmp.lt.s32.totalorder %s27, 1
        %s498 = scalar_select %p497, %s27, 1
        %s499 = scalar_lea.vmem %s6, %s498
        %p500 = scmp.lt.s32.totalorder %s27, 1
        %s501 = scalar_select %p500, %s27, 1
        %s502 = smul.addr %s501, 8
        %s503 = smul.addr %s502, 4
        %s504 = scalar_lea.vmem %s7, %s503
        %p505 = scmp.lt.s32.totalorder %s27, 1
        %s506 = scalar_select %p505, %s27, 1
        %s507 = smul.addr %s506, 8
        %s508 = scalar_lea.vmem %s8, %s507
        %s509 = smul.u32 2, %s26
        %p511 = scmp.eq.s32.totalorder %s27, 0
        // Predicated region
        $region61: #{tpu_custom_call.1} parent=59 // pred_check
          %p512 = pneg %p511
        $region62: #{tpu_custom_call.1} parent=59 // pred_check_branch
          %514 = sbr.rel (%p512) target = $region64
        $region63: #{tpu_custom_call.1} parent=59 // pred_region
          %v515 = vld [vmem:[%s472] sm:$0xff]
          %vm516 = vcmask 261120
          %517 = vst.msk [vmem:[#allocation2] sm:$0xff] %vm516, %v515
          %s518 = scalar_lea.vmem %s472, 8
          %v519 = vld [vmem:[%s518] sm:$0xff]
          %520 = vst.msk [vmem:[#allocation2 + $0x8] sm:$0xff] %vm516, %v519
        $region64: #{tpu_custom_call.1} parent=59 // pred_fallthru
          _
        %v521 = vld [vmem:[#allocation2] sm:$0xff]
        %v522 = vld [vmem:[#allocation2 + $0x8] sm:$0xff]
        %v523 = vld [vmem:[%s508] sm:$0x3f]
        %vm524 = vcmask 261120
        %v525 = vsel %vm524, %v521, 0.0
        %526 = vadd.xlane.f32.xlu0 %v525
        %v527 = vpop.xlane.xlu0 %526
        %v528 = vsel %vm524, %v522, 0.0
        %529 = vadd.xlane.f32.xlu0 %v528
        %v530 = vpop.xlane.xlu0 %529
        %v531 = vrcp.pop 32.0
        %v532 = vmul.f32 %v527, %v531
        %v533 = vmul.f32 %v530, %v531
        %v534 = vsub.f32 %v521, %v532
        %v535 = vsub.f32 %v522, %v533
        %v536 = vmul.f32 %v534, %v534
        %v537 = vmul.f32 %v535, %v535
        %v538 = vsel %vm524, %v536, 0.0
        %539 = vadd.xlane.f32.xlu0 %v538
        %v540 = vpop.xlane.xlu0 %539
        %v541 = vsel %vm524, %v537, 0.0
        %542 = vadd.xlane.f32.xlu0 %v541
        %v543 = vpop.xlane.xlu0 %542
        %v544 = vrcp.pop 31.0
        %v545 = vmul.f32 %v540, %v544
        %v546 = vmul.f32 %v543, %v544
        %v547 = vrsqrt.pop %v545
        %v548 = vmul.f32 %v545, %v547
        %vm549 = vcmp.eq.f32.partialorder %v545, inf
        %v550 = vsel %vm549, %v545, %v548
        %vm551 = vcmp.eq.f32.partialorder %v545, 0.0
        %v552 = vand.u32 %v545, 2147483648
        %v553 = vsel %vm551, %v552, %v550
        %v554 = vrsqrt.pop %v546
        %v555 = vmul.f32 %v546, %v554
        %vm556 = vcmp.eq.f32.partialorder %v546, inf
        %v557 = vsel %vm556, %v546, %v555
        %vm558 = vcmp.eq.f32.partialorder %v546, 0.0
        %v559 = vand.u32 %v546, 2147483648
        %v560 = vsel %vm558, %v559, %v557
        %v561 = vlaneseq
        %v562 = vshrl.u32 %v561, 7
        %v563 = vsub.s32 0, %v562
        %v564 = vrot.slane %v523, %v563
        %v565 = vmul.f32 %v564, %v534
        %v566 = vmul.f32 %v564, %v535
        %v567 = vadd.f32 %v553, 1e-06
        %v568 = vadd.f32 %v560, 1e-06
        %v569 = vrcp.pop %v567
        %v570 = vmul.f32 %v565, %v569
        %v571 = vrcp.pop %v568
        %v572 = vmul.f32 %v566, %v571
        %v573 = vlaneseq
        %v574 = vshrl.u32 %v573, 7
        %v575 = vsub.s32 1, %v574
        %v576 = vrot.slane %v523, %v575
        %v577 = vadd.f32 %v570, %v576
        %v578 = vadd.f32 %v572, %v576
        %v579 = vpack.c.bf16 %v578, %v577
        %v580 = vld [vmem:[%s483] sm:$0xf]
        %v581 = vld [vmem:[%s483 + $0x4] sm:$0xf]
        %v582 = vld [vmem:[%s483 + $0x8] sm:$0xf]
        %v583 = vld [vmem:[%s483 + $0xc] sm:$0xf]
        %v584 = vld [vmem:[%s486] sm:$0x1]
        %v586 = vlaneseq
        %v587 = vshrl.u32 %v586, 7
        %v588 = vsub.s32 0, %v587
        %v589 = vrot.slane %v584, %v588
        %v595 = vunpack.c.l.b16 %v580
        %v596 = vunpack.c.l.b16 %v581
        %v597 = vunpack.c.l.b16 %v582
        %v598 = vunpack.c.l.b16 %v583
        %v599 = vpack.c.b16 %v596, %v595
        %v600 = vpack.c.b16 %v598, %v597
        %v604 = vsel %vm524, %v579, 0
        %606 = vmatprep.subr.bf16.mxu0 0
        %607 = vmatpush1.bf16.msra.mxu0 %v599
        %608 = vmatprep.subr.bf16.mxu0 0
        %609 = vmatpush1.bf16.msra.mxu0 %v600
        %610 = vmatprep.subr.bf16.mxu0 0
        %611 = vmatpush1.bf16.msra.mxu0 0
        %612 = vmatprep.subr.bf16.mxu0 0
        %613 = vmatpush1.bf16.msra.mxu0 0
        %614 = vmatprep.subr.bf16.mxu0 0
        %615 = vmatpush1.bf16.msra.mxu0 0
        %616 = vmatprep.subr.bf16.mxu0 0
        %617 = vmatpush1.bf16.msra.mxu0 0
        %618 = vmatprep.subr.bf16.mxu0 0
        %619 = vmatpush1.bf16.msra.mxu0 0
        %620 = vmatprep.subr.bf16.mxu0 0
        %621 = vmatpush1.bf16.msra.mxu0 0
        %622 = vmatprep.subr.bf16.mxu0 0
        %623 = vmatpush1.bf16.msra.mxu0 0
        %624 = vmatprep.subr.bf16.mxu0 0
        %625 = vmatpush1.bf16.msra.mxu0 0
        %626 = vmatprep.subr.bf16.mxu0 0
        %627 = vmatpush1.bf16.msra.mxu0 0
        %628 = vmatprep.subr.bf16.mxu0 0
        %629 = vmatpush1.bf16.msra.mxu0 0
        %630 = vmatprep.subr.bf16.mxu0 0
        %631 = vmatpush1.bf16.msra.mxu0 0
        %632 = vmatprep.subr.bf16.mxu0 0
        %633 = vmatpush1.bf16.msra.mxu0 0
        %634 = vmatprep.subr.bf16.mxu0 0
        %635 = vmatpush1.bf16.msra.mxu0 0
        %636 = vmatprep.subr.bf16.mxu0 0
        %637 = vmatpush1.bf16.msra.mxu0 0
        %638 = vmatprep.mubr.bf16.mxu0 0
        %639 = vmatmul.mubr.bf16.gmra.mrb[0].mxu0 %v604
        %v640 = vpop.f32.mrb[0].mxu0
        %v641 = vadd.f32 %v589, %v640
        %v642 = vpop.f32.mrb[0].mxu0
        %v643 = vpop.f32.mrb[0].mxu0
        %v644 = vadd.f32 %v589, %v643
        %v645 = vpop.f32.mrb[0].mxu0
        %646 = vdwg.mxu0
        %v647 = vpack.c.bf16 %v644, %v641
        %v648 = vld [vmem:[%s491] sm:$0xf]
        %v649 = vld [vmem:[%s491 + $0x4] sm:$0xf]
        %v650 = vld [vmem:[%s491 + $0x8] sm:$0xf]
        %v651 = vld [vmem:[%s491 + $0xc] sm:$0xf]
        %v652 = vld [vmem:[%s477] sm:$0x1]
        %654 = vrot.lane.b32.xlu0 %v647, 96
        %v655 = vpop.permute.xlu0 %654
        %vm656 = vcmask 64512
        %v658 = vsel %vm656, %v647, 0
        %v661 = vsel %vm656, %v655, 0
        %663 = vmatprep.subr.bf16.mxu0 0
        %664 = vmatpush1.bf16.xpose.msra.mxu0 %v661
        %665 = vmatprep.subr.bf16.mxu0 0
        %666 = vmatpush1.bf16.xpose.msra.mxu0 0
        %667 = vmatprep.subr.bf16.mxu0 0
        %668 = vmatpush1.bf16.xpose.msra.mxu0 0
        %669 = vmatprep.subr.bf16.mxu0 0
        %670 = vmatpush1.bf16.xpose.msra.mxu0 0
        %671 = vmatprep.subr.bf16.mxu0 0
        %672 = vmatpush1.bf16.xpose.msra.mxu0 0
        %673 = vmatprep.subr.bf16.mxu0 0
        %674 = vmatpush1.bf16.xpose.msra.mxu0 0
        %675 = vmatprep.subr.bf16.mxu0 0
        %676 = vmatpush1.bf16.xpose.msra.mxu0 0
        %677 = vmatprep.subr.bf16.mxu0 0
        %678 = vmatpush1.bf16.xpose.msra.mxu0 0
        %679 = vmatprep.subr.bf16.mxu0 0
        %680 = vmatpush1.bf16.xpose.msra.mxu0 0
        %681 = vmatprep.subr.bf16.mxu0 0
        %682 = vmatpush1.bf16.xpose.msra.mxu0 0
        %683 = vmatprep.subr.bf16.mxu0 0
        %684 = vmatpush1.bf16.xpose.msra.mxu0 0
        %685 = vmatprep.subr.bf16.mxu0 0
        %686 = vmatpush1.bf16.xpose.msra.mxu0 0
        %687 = vmatprep.subr.bf16.mxu0 0
        %688 = vmatpush1.bf16.xpose.msra.mxu0 0
        %689 = vmatprep.subr.bf16.mxu0 0
        %690 = vmatpush1.bf16.xpose.msra.mxu0 0
        %691 = vmatprep.subr.bf16.mxu0 0
        %692 = vmatpush1.bf16.xpose.msra.mxu0 0
        %693 = vmatprep.subr.bf16.mxu0 0
        %694 = vmatpush1.bf16.xpose.msra.mxu0 0
        %695 = vmatprep.mubr.bf16.mxu0 0
        %696 = vmatmul.mubr.bf16.gmra.mrb[0].mxu0 %v658
        %v697 = vpop.f32.mrb[0].mxu0
        %v698 = vadd.f32 0.0, %v697
        %v699 = vpop.f32.mrb[0].mxu0
        %v700 = vpop.f32.mrb[0].mxu0
        %v701 = vpop.f32.mrb[0].mxu0
        %702 = vdwg.mxu0
        %v703 = vmul.f32 %v698, 0.35355338
        %v705 = vlaneseq
        %v706 = vshrl.u32 %v705, 7
        %v707 = vsub.s32 0, %v706
        %v708 = vrot.slane %v652, %v707
        %v710 = vadd.f32 %v703, %v708
        %v711 = vsel %vm656, %v710, -inf
        %712 = vmax.xlane.f32.xlu0 %v711
        %v713 = vpop.xlane.xlu0 %712
        %v714 = vsub.f32 %v710, %v713
        %v715 = vmul.f32 %v714, 1.442695
        %v716 = vpow.pop %v715
        %v717 = vsel %vm656, %v716, 0.0
        %718 = vadd.xlane.f32.xlu0 %v717
        %v719 = vpop.xlane.xlu0 %718
        %v720 = vrcp.pop %v719
        %v721 = vmul.f32 %v716, %v720
        %v722 = vpack.c.bf16 %v721, %v721
        %723 = vrot.lane.b32.xlu0 %v647, 64
        %v724 = vpop.permute.xlu0 %723
        %v726 = vsel %vm656, %v722, 0
        %vm728 = vcmask 1043456
        %v730 = vsel %vm728, %v724, 0
        %732 = vmatprep.subr.bf16.mxu0 0
        %733 = vmatpush1.bf16.msra.mxu0 %v730
        %734 = vmatprep.subr.bf16.mxu0 0
        %735 = vmatpush1.bf16.msra.mxu0 0
        %736 = vmatprep.subr.bf16.mxu0 0
        %737 = vmatpush1.bf16.msra.mxu0 0
        %738 = vmatprep.subr.bf16.mxu0 0
        %739 = vmatpush1.bf16.msra.mxu0 0
        %740 = vmatprep.subr.bf16.mxu0 0
        %741 = vmatpush1.bf16.msra.mxu0 0
        %742 = vmatprep.subr.bf16.mxu0 0
        %743 = vmatpush1.bf16.msra.mxu0 0
        %744 = vmatprep.subr.bf16.mxu0 0
        %745 = vmatpush1.bf16.msra.mxu0 0
        %746 = vmatprep.subr.bf16.mxu0 0
        %747 = vmatpush1.bf16.msra.mxu0 0
        %748 = vmatprep.subr.bf16.mxu0 0
        %749 = vmatpush1.bf16.msra.mxu0 0
        %750 = vmatprep.subr.bf16.mxu0 0
        %751 = vmatpush1.bf16.msra.mxu0 0
        %752 = vmatprep.subr.bf16.mxu0 0
        %753 = vmatpush1.bf16.msra.mxu0 0
        %754 = vmatprep.subr.bf16.mxu0 0
        %755 = vmatpush1.bf16.msra.mxu0 0
        %756 = vmatprep.subr.bf16.mxu0 0
        %757 = vmatpush1.bf16.msra.mxu0 0
        %758 = vmatprep.subr.bf16.mxu0 0
        %759 = vmatpush1.bf16.msra.mxu0 0
        %760 = vmatprep.subr.bf16.mxu0 0
        %761 = vmatpush1.bf16.msra.mxu0 0
        %762 = vmatprep.subr.bf16.mxu0 0
        %763 = vmatpush1.bf16.msra.mxu0 0
        %764 = vmatprep.mubr.bf16.mxu0 0
        %765 = vmatmul.mubr.bf16.gmra.mrb[0].mxu0 %v726
        %v766 = vpop.f32.mrb[0].mxu0
        %v767 = vadd.f32 0.0, %v766
        %v768 = vpop.f32.mrb[0].mxu0
        %v769 = vpop.f32.mrb[0].mxu0
        %v770 = vpop.f32.mrb[0].mxu0
        %771 = vdwg.mxu0
        %v772 = vpack.c.bf16 %v767, %v767
        %773 = vrot.lane.b32.xlu0 %v647, 120
        %v774 = vpop.permute.xlu0 %773
        %775 = vrot.lane.b32.xlu0 %v647, 88
        %v776 = vpop.permute.xlu0 %775
        %v778 = vsel %vm656, %v774, 0
        %v781 = vsel %vm656, %v776, 0
        %783 = vmatprep.subr.bf16.mxu0 0
        %784 = vmatpush1.bf16.xpose.msra.mxu0 %v781
        %785 = vmatprep.subr.bf16.mxu0 0
        %786 = vmatpush1.bf16.xpose.msra.mxu0 0
        %787 = vmatprep.subr.bf16.mxu0 0
        %788 = vmatpush1.bf16.xpose.msra.mxu0 0
        %789 = vmatprep.subr.bf16.mxu0 0
        %790 = vmatpush1.bf16.xpose.msra.mxu0 0
        %791 = vmatprep.subr.bf16.mxu0 0
        %792 = vmatpush1.bf16.xpose.msra.mxu0 0
        %793 = vmatprep.subr.bf16.mxu0 0
        %794 = vmatpush1.bf16.xpose.msra.mxu0 0
        %795 = vmatprep.subr.bf16.mxu0 0
        %796 = vmatpush1.bf16.xpose.msra.mxu0 0
        %797 = vmatprep.subr.bf16.mxu0 0
        %798 = vmatpush1.bf16.xpose.msra.mxu0 0
        %799 = vmatprep.subr.bf16.mxu0 0
        %800 = vmatpush1.bf16.xpose.msra.mxu0 0
        %801 = vmatprep.subr.bf16.mxu0 0
        %802 = vmatpush1.bf16.xpose.msra.mxu0 0
        %803 = vmatprep.subr.bf16.mxu0 0
        %804 = vmatpush1.bf16.xpose.msra.mxu0 0
        %805 = vmatprep.subr.bf16.mxu0 0
        %806 = vmatpush1.bf16.xpose.msra.mxu0 0
        %807 = vmatprep.subr.bf16.mxu0 0
        %808 = vmatpush1.bf16.xpose.msra.mxu0 0
        %809 = vmatprep.subr.bf16.mxu0 0
        %810 = vmatpush1.bf16.xpose.msra.mxu0 0
        %811 = vmatprep.subr.bf16.mxu0 0
        %812 = vmatpush1.bf16.xpose.msra.mxu0 0
        %813 = vmatprep.subr.bf16.mxu0 0
        %814 = vmatpush1.bf16.xpose.msra.mxu0 0
        %815 = vmatprep.mubr.bf16.mxu0 0
        %816 = vmatmul.mubr.bf16.gmra.mrb[0].mxu0 %v778
        %v817 = vpop.f32.mrb[0].mxu0
        %v818 = vadd.f32 0.0, %v817
        %v819 = vpop.f32.mrb[0].mxu0
        %v820 = vpop.f32.mrb[0].mxu0
        %v821 = vpop.f32.mrb[0].mxu0
        %822 = vdwg.mxu0
        %v823 = vmul.f32 %v818, 0.35355338
        %v824 = vadd.f32 %v823, %v708
        %v825 = vsel %vm656, %v824, -inf
        %826 = vmax.xlane.f32.xlu0 %v825
        %v827 = vpop.xlane.xlu0 %826
        %v828 = vsub.f32 %v824, %v827
        %v829 = vmul.f32 %v828, 1.442695
        %v830 = vpow.pop %v829
        %v831 = vsel %vm656, %v830, 0.0
        %832 = vadd.xlane.f32.xlu0 %v831
        %v833 = vpop.xlane.xlu0 %832
        %v834 = vrcp.pop %v833
        %v835 = vmul.f32 %v830, %v834
        %v836 = vpack.c.bf16 %v835, %v835
        %837 = vrot.lane.b32.xlu0 %v647, 56
        %v838 = vpop.permute.xlu0 %837
        %v840 = vsel %vm656, %v836, 0
        %v843 = vsel %vm728, %v838, 0
        %845 = vmatprep.subr.bf16.mxu0 0
        %846 = vmatpush1.bf16.msra.mxu0 %v843
        %847 = vmatprep.subr.bf16.mxu0 0
        %848 = vmatpush1.bf16.msra.mxu0 0
        %849 = vmatprep.subr.bf16.mxu0 0
        %850 = vmatpush1.bf16.msra.mxu0 0
        %851 = vmatprep.subr.bf16.mxu0 0
        %852 = vmatpush1.bf16.msra.mxu0 0
        %853 = vmatprep.subr.bf16.mxu0 0
        %854 = vmatpush1.bf16.msra.mxu0 0
        %855 = vmatprep.subr.bf16.mxu0 0
        %856 = vmatpush1.bf16.msra.mxu0 0
        %857 = vmatprep.subr.bf16.mxu0 0
        %858 = vmatpush1.bf16.msra.mxu0 0
        %859 = vmatprep.subr.bf16.mxu0 0
        %860 = vmatpush1.bf16.msra.mxu0 0
        %861 = vmatprep.subr.bf16.mxu0 0
        %862 = vmatpush1.bf16.msra.mxu0 0
        %863 = vmatprep.subr.bf16.mxu0 0
        %864 = vmatpush1.bf16.msra.mxu0 0
        %865 = vmatprep.subr.bf16.mxu0 0
        %866 = vmatpush1.bf16.msra.mxu0 0
        %867 = vmatprep.subr.bf16.mxu0 0
        %868 = vmatpush1.bf16.msra.mxu0 0
        %869 = vmatprep.subr.bf16.mxu0 0
        %870 = vmatpush1.bf16.msra.mxu0 0
        %871 = vmatprep.subr.bf16.mxu0 0
        %872 = vmatpush1.bf16.msra.mxu0 0
        %873 = vmatprep.subr.bf16.mxu0 0
        %874 = vmatpush1.bf16.msra.mxu0 0
        %875 = vmatprep.subr.bf16.mxu0 0
        %876 = vmatpush1.bf16.msra.mxu0 0
        %877 = vmatprep.mubr.bf16.mxu0 0
        %878 = vmatmul.mubr.bf16.gmra.mrb[0].mxu0 %v840
        %v879 = vpop.f32.mrb[0].mxu0
        %v880 = vadd.f32 0.0, %v879
        %v881 = vpop.f32.mrb[0].mxu0
        %v882 = vpop.f32.mrb[0].mxu0
        %v883 = vpop.f32.mrb[0].mxu0
        %884 = vdwg.mxu0
        %v885 = vpack.c.bf16 %v880, %v880
        %v887 = vsel %vm656, %v885, 0
        %v890 = vsel %vm728, %v649, 0
        %892 = vmatprep.subr.bf16.mxu0 0
        %893 = vmatpush1.bf16.msra.mxu0 %v890
        %894 = vmatprep.subr.bf16.mxu0 0
        %895 = vmatpush1.bf16.msra.mxu0 0
        %896 = vmatprep.subr.bf16.mxu0 0
        %897 = vmatpush1.bf16.msra.mxu0 0
        %898 = vmatprep.subr.bf16.mxu0 0
        %899 = vmatpush1.bf16.msra.mxu0 0
        %900 = vmatprep.subr.bf16.mxu0 0
        %901 = vmatpush1.bf16.msra.mxu0 0
        %902 = vmatprep.subr.bf16.mxu0 0
        %903 = vmatpush1.bf16.msra.mxu0 0
        %904 = vmatprep.subr.bf16.mxu0 0
        %905 = vmatpush1.bf16.msra.mxu0 0
        %906 = vmatprep.subr.bf16.mxu0 0
        %907 = vmatpush1.bf16.msra.mxu0 0
        %908 = vmatprep.subr.bf16.mxu0 0
        %909 = vmatpush1.bf16.msra.mxu0 0
        %910 = vmatprep.subr.bf16.mxu0 0
        %911 = vmatpush1.bf16.msra.mxu0 0
        %912 = vmatprep.subr.bf16.mxu0 0
        %913 = vmatpush1.bf16.msra.mxu0 0
        %914 = vmatprep.subr.bf16.mxu0 0
        %915 = vmatpush1.bf16.msra.mxu0 0
        %916 = vmatprep.subr.bf16.mxu0 0
        %917 = vmatpush1.bf16.msra.mxu0 0
        %918 = vmatprep.subr.bf16.mxu0 0
        %919 = vmatpush1.bf16.msra.mxu0 0
        %920 = vmatprep.subr.bf16.mxu0 0
        %921 = vmatpush1.bf16.msra.mxu0 0
        %922 = vmatprep.subr.bf16.mxu0 0
        %923 = vmatpush1.bf16.msra.mxu0 0
        %924 = vmatprep.mubr.bf16.mxu0 0
        %925 = vmatmul.mubr.bf16.gmra.mrb[0].mxu0 %v887
        %v926 = vpop.f32.mrb[0].mxu0
        %v927 = vadd.f32 0.0, %v926
        %v928 = vpop.f32.mrb[0].mxu0
        %v929 = vpop.f32.mrb[0].mxu0
        %v930 = vpop.f32.mrb[0].mxu0
        %931 = vdwg.mxu0
        %v933 = vsel %vm656, %v772, 0
        %v936 = vsel %vm728, %v648, 0
        %938 = vmatprep.subr.bf16.mxu0 0
        %939 = vmatpush1.bf16.msra.mxu0 %v936
        %940 = vmatprep.subr.bf16.mxu0 0
        %941 = vmatpush1.bf16.msra.mxu0 0
        %942 = vmatprep.subr.bf16.mxu0 0
        %943 = vmatpush1.bf16.msra.mxu0 0
        %944 = vmatprep.subr.bf16.mxu0 0
        %945 = vmatpush1.bf16.msra.mxu0 0
        %946 = vmatprep.subr.bf16.mxu0 0
        %947 = vmatpush1.bf16.msra.mxu0 0
        %948 = vmatprep.subr.bf16.mxu0 0
        %949 = vmatpush1.bf16.msra.mxu0 0
        %950 = vmatprep.subr.bf16.mxu0 0
        %951 = vmatpush1.bf16.msra.mxu0 0
        %952 = vmatprep.subr.bf16.mxu0 0
        %953 = vmatpush1.bf16.msra.mxu0 0
        %954 = vmatprep.subr.bf16.mxu0 0
        %955 = vmatpush1.bf16.msra.mxu0 0
        %956 = vmatprep.subr.bf16.mxu0 0
        %957 = vmatpush1.bf16.msra.mxu0 0
        %958 = vmatprep.subr.bf16.mxu0 0
        %959 = vmatpush1.bf16.msra.mxu0 0
        %960 = vmatprep.subr.bf16.mxu0 0
        %961 = vmatpush1.bf16.msra.mxu0 0
        %962 = vmatprep.subr.bf16.mxu0 0
        %963 = vmatpush1.bf16.msra.mxu0 0
        %964 = vmatprep.subr.bf16.mxu0 0
        %965 = vmatpush1.bf16.msra.mxu0 0
        %966 = vmatprep.subr.bf16.mxu0 0
        %967 = vmatpush1.bf16.msra.mxu0 0
        %968 = vmatprep.subr.bf16.mxu0 0
        %969 = vmatpush1.bf16.msra.mxu0 0
        %970 = vmatprep.mubr.bf16.mxu0 0
        %971 = vmatmul.mubr.bf16.gmra.mrb[0].mxu0 %v933
        %v972 = vpop.f32.mrb[0].mxu0
        %v973 = vadd.f32 %v927, %v972
        %v974 = vpop.f32.mrb[0].mxu0
        %v975 = vpop.f32.mrb[0].mxu0
        %v976 = vpop.f32.mrb[0].mxu0
        %977 = vdwg.mxu0
        %978 = vrot.lane.b32.xlu0 %v647, 112
        %v979 = vpop.permute.xlu0 %978
        %980 = vrot.lane.b32.xlu0 %v647, 80
        %v981 = vpop.permute.xlu0 %980
        %v983 = vsel %vm656, %v979, 0
        %v986 = vsel %vm656, %v981, 0
        %988 = vmatprep.subr.bf16.mxu0 0
        %989 = vmatpush1.bf16.xpose.msra.mxu0 %v986
        %990 = vmatprep.subr.bf16.mxu0 0
        %991 = vmatpush1.bf16.xpose.msra.mxu0 0
        %992 = vmatprep.subr.bf16.mxu0 0
        %993 = vmatpush1.bf16.xpose.msra.mxu0 0
        %994 = vmatprep.subr.bf16.mxu0 0
        %995 = vmatpush1.bf16.xpose.msra.mxu0 0
        %996 = vmatprep.subr.bf16.mxu0 0
        %997 = vmatpush1.bf16.xpose.msra.mxu0 0
        %998 = vmatprep.subr.bf16.mxu0 0
        %999 = vmatpush1.bf16.xpose.msra.mxu0 0
        %1000 = vmatprep.subr.bf16.mxu0 0
        %1001 = vmatpush1.bf16.xpose.msra.mxu0 0
        %1002 = vmatprep.subr.bf16.mxu0 0
        %1003 = vmatpush1.bf16.xpose.msra.mxu0 0
        %1004 = vmatprep.subr.bf16.mxu0 0
        %1005 = vmatpush1.bf16.xpose.msra.mxu0 0
        %1006 = vmatprep.subr.bf16.mxu0 0
        %1007 = vmatpush1.bf16.xpose.msra.mxu0 0
        %1008 = vmatprep.subr.bf16.mxu0 0
        %1009 = vmatpush1.bf16.xpose.msra.mxu0 0
        %1010 = vmatprep.subr.bf16.mxu0 0
        %1011 = vmatpush1.bf16.xpose.msra.mxu0 0
        %1012 = vmatprep.subr.bf16.mxu0 0
        %1013 = vmatpush1.bf16.xpose.msra.mxu0 0
        %1014 = vmatprep.subr.bf16.mxu0 0
        %1015 = vmatpush1.bf16.xpose.msra.mxu0 0
        %1016 = vmatprep.subr.bf16.mxu0 0
        %1017 = vmatpush1.bf16.xpose.msra.mxu0 0
        %1018 = vmatprep.subr.bf16.mxu0 0
        %1019 = vmatpush1.bf16.xpose.msra.mxu0 0
        %1020 = vmatprep.mubr.bf16.mxu0 0
        %1021 = vmatmul.mubr.bf16.gmra.mrb[0].mxu0 %v983
        %v1022 = vpop.f32.mrb[0].mxu0
        %v1023 = vadd.f32 0.0, %v1022
        %v1024 = vpop.f32.mrb[0].mxu0
        %v1025 = vpop.f32.mrb[0].mxu0
        %v1026 = vpop.f32.mrb[0].mxu0
        %1027 = vdwg.mxu0
        %v1028 = vmul.f32 %v1023, 0.35355338
        %v1029 = vadd.f32 %v1028, %v708
        %v1030 = vsel %vm656, %v1029, -inf
        %1031 = vmax.xlane.f32.xlu0 %v1030
        %v1032 = vpop.xlane.xlu0 %1031
        %v1033 = vsub.f32 %v1029, %v1032
        %v1034 = vmul.f32 %v1033, 1.442695
        %v1035 = vpow.pop %v1034
        %v1036 = vsel %vm656, %v1035, 0.0
        %1037 = vadd.xlane.f32.xlu0 %v1036
        %v1038 = vpop.xlane.xlu0 %1037
        %v1039 = vrcp.pop %v1038
        %v1040 = vmul.f32 %v1035, %v1039
        %v1041 = vpack.c.bf16 %v1040, %v1040
        %1042 = vrot.lane.b32.xlu0 %v647, 48
        %v1043 = vpop.permute.xlu0 %1042
        %v1045 = vsel %vm656, %v1041, 0
        %v1048 = vsel %vm728, %v1043, 0
        %1050 = vmatprep.subr.bf16.mxu0 0
        %1051 = vmatpush1.bf16.msra.mxu0 %v1048
        %1052 = vmatprep.subr.bf16.mxu0 0
        %1053 = vmatpush1.bf16.msra.mxu0 0
        %1054 = vmatprep.subr.bf16.mxu0 0
        %1055 = vmatpush1.bf16.msra.mxu0 0
        %1056 = vmatprep.subr.bf16.mxu0 0
        %1057 = vmatpush1.bf16.msra.mxu0 0
        %1058 = vmatprep.subr.bf16.mxu0 0
        %1059 = vmatpush1.bf16.msra.mxu0 0
        %1060 = vmatprep.subr.bf16.mxu0 0
        %1061 = vmatpush1.bf16.msra.mxu0 0
        %1062 = vmatprep.subr.bf16.mxu0 0
        %1063 = vmatpush1.bf16.msra.mxu0 0
        %1064 = vmatprep.subr.bf16.mxu0 0
        %1065 = vmatpush1.bf16.msra.mxu0 0
        %1066 = vmatprep.subr.bf16.mxu0 0
        %1067 = vmatpush1.bf16.msra.mxu0 0
        %1068 = vmatprep.subr.bf16.mxu0 0
        %1069 = vmatpush1.bf16.msra.mxu0 0
        %1070 = vmatprep.subr.bf16.mxu0 0
        %1071 = vmatpush1.bf16.msra.mxu0 0
        %1072 = vmatprep.subr.bf16.mxu0 0
        %1073 = vmatpush1.bf16.msra.mxu0 0
        %1074 = vmatprep.subr.bf16.mxu0 0
        %1075 = vmatpush1.bf16.msra.mxu0 0
        %1076 = vmatprep.subr.bf16.mxu0 0
        %1077 = vmatpush1.bf16.msra.mxu0 0
        %1078 = vmatprep.subr.bf16.mxu0 0
        %1079 = vmatpush1.bf16.msra.mxu0 0
        %1080 = vmatprep.subr.bf16.mxu0 0
        %1081 = vmatpush1.bf16.msra.mxu0 0
        %1082 = vmatprep.mubr.bf16.mxu0 0
        %1083 = vmatmul.mubr.bf16.gmra.mrb[0].mxu0 %v1045
        %v1084 = vpop.f32.mrb[0].mxu0
        %v1085 = vadd.f32 0.0, %v1084
        %v1086 = vpop.f32.mrb[0].mxu0
        %v1087 = vpop.f32.mrb[0].mxu0
        %v1088 = vpop.f32.mrb[0].mxu0
        %1089 = vdwg.mxu0
        %v1090 = vpack.c.bf16 %v1085, %v1085
        %v1092 = vsel %vm656, %v1090, 0
        %v1095 = vsel %vm728, %v650, 0
        %1097 = vmatprep.subr.bf16.mxu0 0
        %1098 = vmatpush1.bf16.msra.mxu0 %v1095
        %1099 = vmatprep.subr.bf16.mxu0 0
        %1100 = vmatpush1.bf16.msra.mxu0 0
        %1101 = vmatprep.subr.bf16.mxu0 0
        %1102 = vmatpush1.bf16.msra.mxu0 0
        %1103 = vmatprep.subr.bf16.mxu0 0
        %1104 = vmatpush1.bf16.msra.mxu0 0
        %1105 = vmatprep.subr.bf16.mxu0 0
        %1106 = vmatpush1.bf16.msra.mxu0 0
        %1107 = vmatprep.subr.bf16.mxu0 0
        %1108 = vmatpush1.bf16.msra.mxu0 0
        %1109 = vmatprep.subr.bf16.mxu0 0
        %1110 = vmatpush1.bf16.msra.mxu0 0
        %1111 = vmatprep.subr.bf16.mxu0 0
        %1112 = vmatpush1.bf16.msra.mxu0 0
        %1113 = vmatprep.subr.bf16.mxu0 0
        %1114 = vmatpush1.bf16.msra.mxu0 0
        %1115 = vmatprep.subr.bf16.mxu0 0
        %1116 = vmatpush1.bf16.msra.mxu0 0
        %1117 = vmatprep.subr.bf16.mxu0 0
        %1118 = vmatpush1.bf16.msra.mxu0 0
        %1119 = vmatprep.subr.bf16.mxu0 0
        %1120 = vmatpush1.bf16.msra.mxu0 0
        %1121 = vmatprep.subr.bf16.mxu0 0
        %1122 = vmatpush1.bf16.msra.mxu0 0
        %1123 = vmatprep.subr.bf16.mxu0 0
        %1124 = vmatpush1.bf16.msra.mxu0 0
        %1125 = vmatprep.subr.bf16.mxu0 0
        %1126 = vmatpush1.bf16.msra.mxu0 0
        %1127 = vmatprep.subr.bf16.mxu0 0
        %1128 = vmatpush1.bf16.msra.mxu0 0
        %1129 = vmatprep.mubr.bf16.mxu0 0
        %1130 = vmatmul.mubr.bf16.gmra.mrb[0].mxu0 %v1092
        %v1131 = vpop.f32.mrb[0].mxu0
        %v1132 = vadd.f32 0.0, %v1131
        %v1133 = vpop.f32.mrb[0].mxu0
        %v1134 = vpop.f32.mrb[0].mxu0
        %v1135 = vpop.f32.mrb[0].mxu0
        %1136 = vdwg.mxu0
        %v1137 = vadd.f32 %v973, %v1132
        %1138 = vrot.lane.b32.xlu0 %v647, 104
        %v1139 = vpop.permute.xlu0 %1138
        %1140 = vrot.lane.b32.xlu0 %v647, 72
        %v1141 = vpop.permute.xlu0 %1140
        %v1143 = vsel %vm656, %v1139, 0
        %v1146 = vsel %vm656, %v1141, 0
        %1148 = vmatprep.subr.bf16.mxu0 0
        %1149 = vmatpush1.bf16.xpose.msra.mxu0 %v1146
        %1150 = vmatprep.subr.bf16.mxu0 0
        %1151 = vmatpush1.bf16.xpose.msra.mxu0 0
        %1152 = vmatprep.subr.bf16.mxu0 0
        %1153 = vmatpush1.bf16.xpose.msra.mxu0 0
        %1154 = vmatprep.subr.bf16.mxu0 0
        %1155 = vmatpush1.bf16.xpose.msra.mxu0 0
        %1156 = vmatprep.subr.bf16.mxu0 0
        %1157 = vmatpush1.bf16.xpose.msra.mxu0 0
        %1158 = vmatprep.subr.bf16.mxu0 0
        %1159 = vmatpush1.bf16.xpose.msra.mxu0 0
        %1160 = vmatprep.subr.bf16.mxu0 0
        %1161 = vmatpush1.bf16.xpose.msra.mxu0 0
        %1162 = vmatprep.subr.bf16.mxu0 0
        %1163 = vmatpush1.bf16.xpose.msra.mxu0 0
        %1164 = vmatprep.subr.bf16.mxu0 0
        %1165 = vmatpush1.bf16.xpose.msra.mxu0 0
        %1166 = vmatprep.subr.bf16.mxu0 0
        %1167 = vmatpush1.bf16.xpose.msra.mxu0 0
        %1168 = vmatprep.subr.bf16.mxu0 0
        %1169 = vmatpush1.bf16.xpose.msra.mxu0 0
        %1170 = vmatprep.subr.bf16.mxu0 0
        %1171 = vmatpush1.bf16.xpose.msra.mxu0 0
        %1172 = vmatprep.subr.bf16.mxu0 0
        %1173 = vmatpush1.bf16.xpose.msra.mxu0 0
        %1174 = vmatprep.subr.bf16.mxu0 0
        %1175 = vmatpush1.bf16.xpose.msra.mxu0 0
        %1176 = vmatprep.subr.bf16.mxu0 0
        %1177 = vmatpush1.bf16.xpose.msra.mxu0 0
        %1178 = vmatprep.subr.bf16.mxu0 0
        %1179 = vmatpush1.bf16.xpose.msra.mxu0 0
        %1180 = vmatprep.mubr.bf16.mxu0 0
        %1181 = vmatmul.mubr.bf16.gmra.mrb[0].mxu0 %v1143
        %v1182 = vpop.f32.mrb[0].mxu0
        %v1183 = vadd.f32 0.0, %v1182
        %v1184 = vpop.f32.mrb[0].mxu0
        %v1185 = vpop.f32.mrb[0].mxu0
        %v1186 = vpop.f32.mrb[0].mxu0
        %1187 = vdwg.mxu0
        %v1188 = vmul.f32 %v1183, 0.35355338
        %v1189 = vadd.f32 %v1188, %v708
        %v1190 = vsel %vm656, %v1189, -inf
        %1191 = vmax.xlane.f32.xlu0 %v1190
        %v1192 = vpop.xlane.xlu0 %1191
        %v1193 = vsub.f32 %v1189, %v1192
        %v1194 = vmul.f32 %v1193, 1.442695
        %v1195 = vpow.pop %v1194
        %v1196 = vsel %vm656, %v1195, 0.0
        %1197 = vadd.xlane.f32.xlu0 %v1196
        %v1198 = vpop.xlane.xlu0 %1197
        %v1199 = vrcp.pop %v1198
        %v1200 = vmul.f32 %v1195, %v1199
        %v1201 = vpack.c.bf16 %v1200, %v1200
        %1202 = vrot.lane.b32.xlu0 %v647, 40
        %v1203 = vpop.permute.xlu0 %1202
        %v1205 = vsel %vm656, %v1201, 0
        %v1208 = vsel %vm728, %v1203, 0
        %1210 = vmatprep.subr.bf16.mxu0 0
        %1211 = vmatpush1.bf16.msra.mxu0 %v1208
        %1212 = vmatprep.subr.bf16.mxu0 0
        %1213 = vmatpush1.bf16.msra.mxu0 0
        %1214 = vmatprep.subr.bf16.mxu0 0
        %1215 = vmatpush1.bf16.msra.mxu0 0
        %1216 = vmatprep.subr.bf16.mxu0 0
        %1217 = vmatpush1.bf16.msra.mxu0 0
        %1218 = vmatprep.subr.bf16.mxu0 0
        %1219 = vmatpush1.bf16.msra.mxu0 0
        %1220 = vmatprep.subr.bf16.mxu0 0
        %1221 = vmatpush1.bf16.msra.mxu0 0
        %1222 = vmatprep.subr.bf16.mxu0 0
        %1223 = vmatpush1.bf16.msra.mxu0 0
        %1224 = vmatprep.subr.bf16.mxu0 0
        %1225 = vmatpush1.bf16.msra.mxu0 0
        %1226 = vmatprep.subr.bf16.mxu0 0
        %1227 = vmatpush1.bf16.msra.mxu0 0
        %1228 = vmatprep.subr.bf16.mxu0 0
        %1229 = vmatpush1.bf16.msra.mxu0 0
        %1230 = vmatprep.subr.bf16.mxu0 0
        %1231 = vmatpush1.bf16.msra.mxu0 0
        %1232 = vmatprep.subr.bf16.mxu0 0
        %1233 = vmatpush1.bf16.msra.mxu0 0
        %1234 = vmatprep.subr.bf16.mxu0 0
        %1235 = vmatpush1.bf16.msra.mxu0 0
        %1236 = vmatprep.subr.bf16.mxu0 0
        %1237 = vmatpush1.bf16.msra.mxu0 0
        %1238 = vmatprep.subr.bf16.mxu0 0
        %1239 = vmatpush1.bf16.msra.mxu0 0
        %1240 = vmatprep.subr.bf16.mxu0 0
        %1241 = vmatpush1.bf16.msra.mxu0 0
        %1242 = vmatprep.mubr.bf16.mxu0 0
        %1243 = vmatmul.mubr.bf16.gmra.mrb[0].mxu0 %v1205
        %v1244 = vpop.f32.mrb[0].mxu0
        %v1245 = vadd.f32 0.0, %v1244
        %v1246 = vpop.f32.mrb[0].mxu0
        %v1247 = vpop.f32.mrb[0].mxu0
        %v1248 = vpop.f32.mrb[0].mxu0
        %1249 = vdwg.mxu0
        %v1250 = vpack.c.bf16 %v1245, %v1245
        %v1252 = vsel %vm656, %v1250, 0
        %v1255 = vsel %vm728, %v651, 0
        %1257 = vmatprep.subr.bf16.mxu0 0
        %1258 = vmatpush1.bf16.msra.mxu0 %v1255
        %1259 = vmatprep.subr.bf16.mxu0 0
        %1260 = vmatpush1.bf16.msra.mxu0 0
        %1261 = vmatprep.subr.bf16.mxu0 0
        %1262 = vmatpush1.bf16.msra.mxu0 0
        %1263 = vmatprep.subr.bf16.mxu0 0
        %1264 = vmatpush1.bf16.msra.mxu0 0
        %1265 = vmatprep.subr.bf16.mxu0 0
        %1266 = vmatpush1.bf16.msra.mxu0 0
        %1267 = vmatprep.subr.bf16.mxu0 0
        %1268 = vmatpush1.bf16.msra.mxu0 0
        %1269 = vmatprep.subr.bf16.mxu0 0
        %1270 = vmatpush1.bf16.msra.mxu0 0
        %1271 = vmatprep.subr.bf16.mxu0 0
        %1272 = vmatpush1.bf16.msra.mxu0 0
        %1273 = vmatprep.subr.bf16.mxu0 0
        %1274 = vmatpush1.bf16.msra.mxu0 0
        %1275 = vmatprep.subr.bf16.mxu0 0
        %1276 = vmatpush1.bf16.msra.mxu0 0
        %1277 = vmatprep.subr.bf16.mxu0 0
        %1278 = vmatpush1.bf16.msra.mxu0 0
        %1279 = vmatprep.subr.bf16.mxu0 0
        %1280 = vmatpush1.bf16.msra.mxu0 0
        %1281 = vmatprep.subr.bf16.mxu0 0
        %1282 = vmatpush1.bf16.msra.mxu0 0
        %1283 = vmatprep.subr.bf16.mxu0 0
        %1284 = vmatpush1.bf16.msra.mxu0 0
        %1285 = vmatprep.subr.bf16.mxu0 0
        %1286 = vmatpush1.bf16.msra.mxu0 0
        %1287 = vmatprep.subr.bf16.mxu0 0
        %1288 = vmatpush1.bf16.msra.mxu0 0
        %1289 = vmatprep.mubr.bf16.mxu0 0
        %1290 = vmatmul.mubr.bf16.gmra.mrb[0].mxu0 %v1252
        %v1291 = vpop.f32.mrb[0].mxu0
        %v1292 = vadd.f32 0.0, %v1291
        %v1293 = vpop.f32.mrb[0].mxu0
        %v1294 = vpop.f32.mrb[0].mxu0
        %v1295 = vpop.f32.mrb[0].mxu0
        %1296 = vdwg.mxu0
        %v1297 = vadd.f32 %v1137, %v1292
        %s1298 = scalar_lea.vmem %s477, 1
        %v1299 = vld [vmem:[%s1298] sm:$0x1]
        %v1300 = vrot.slane %v647, 4
        %1301 = vrot.lane.b32.xlu0 %v1300, 96
        %v1302 = vpop.permute.xlu0 %1301
        %v1304 = vsel %vm656, %v1300, 0
        %v1307 = vsel %vm656, %v1302, 0
        %1309 = vmatprep.subr.bf16.mxu0 0
        %1310 = vmatpush1.bf16.xpose.msra.mxu0 %v1307
        %1311 = vmatprep.subr.bf16.mxu0 0
        %1312 = vmatpush1.bf16.xpose.msra.mxu0 0
        %1313 = vmatprep.subr.bf16.mxu0 0
        %1314 = vmatpush1.bf16.xpose.msra.mxu0 0
        %1315 = vmatprep.subr.bf16.mxu0 0
        %1316 = vmatpush1.bf16.xpose.msra.mxu0 0
        %1317 = vmatprep.subr.bf16.mxu0 0
        %1318 = vmatpush1.bf16.xpose.msra.mxu0 0
        %1319 = vmatprep.subr.bf16.mxu0 0
        %1320 = vmatpush1.bf16.xpose.msra.mxu0 0
        %1321 = vmatprep.subr.bf16.mxu0 0
        %1322 = vmatpush1.bf16.xpose.msra.mxu0 0
        %1323 = vmatprep.subr.bf16.mxu0 0
        %1324 = vmatpush1.bf16.xpose.msra.mxu0 0
        %1325 = vmatprep.subr.bf16.mxu0 0
        %1326 = vmatpush1.bf16.xpose.msra.mxu0 0
        %1327 = vmatprep.subr.bf16.mxu0 0
        %1328 = vmatpush1.bf16.xpose.msra.mxu0 0
        %1329 = vmatprep.subr.bf16.mxu0 0
        %1330 = vmatpush1.bf16.xpose.msra.mxu0 0
        %1331 = vmatprep.subr.bf16.mxu0 0
        %1332 = vmatpush1.bf16.xpose.msra.mxu0 0
        %1333 = vmatprep.subr.bf16.mxu0 0
        %1334 = vmatpush1.bf16.xpose.msra.mxu0 0
        %1335 = vmatprep.subr.bf16.mxu0 0
        %1336 = vmatpush1.bf16.xpose.msra.mxu0 0
        %1337 = vmatprep.subr.bf16.mxu0 0
        %1338 = vmatpush1.bf16.xpose.msra.mxu0 0
        %1339 = vmatprep.subr.bf16.mxu0 0
        %1340 = vmatpush1.bf16.xpose.msra.mxu0 0
        %1341 = vmatprep.mubr.bf16.mxu0 0
        %1342 = vmatmul.mubr.bf16.gmra.mrb[0].mxu0 %v1304
        %v1343 = vpop.f32.mrb[0].mxu0
        %v1344 = vadd.f32 0.0, %v1343
        %v1345 = vpop.f32.mrb[0].mxu0
        %v1346 = vpop.f32.mrb[0].mxu0
        %v1347 = vpop.f32.mrb[0].mxu0
        %1348 = vdwg.mxu0
        %v1349 = vmul.f32 %v1344, 0.35355338
        %v1351 = vlaneseq
        %v1352 = vshrl.u32 %v1351, 7
        %v1353 = vsub.s32 0, %v1352
        %v1354 = vrot.slane %v1299, %v1353
        %v1356 = vadd.f32 %v1349, %v1354
        %v1357 = vsel %vm656, %v1356, -inf
        %1358 = vmax.xlane.f32.xlu0 %v1357
        %v1359 = vpop.xlane.xlu0 %1358
        %v1360 = vsub.f32 %v1356, %v1359
        %v1361 = vmul.f32 %v1360, 1.442695
        %v1362 = vpow.pop %v1361
        %v1363 = vsel %vm656, %v1362, 0.0
        %1364 = vadd.xlane.f32.xlu0 %v1363
        %v1365 = vpop.xlane.xlu0 %1364
        %v1366 = vrcp.pop %v1365
        %v1367 = vmul.f32 %v1362, %v1366
        %v1368 = vpack.c.bf16 %v1367, %v1367
        %1369 = vrot.lane.b32.xlu0 %v1300, 64
        %v1370 = vpop.permute.xlu0 %1369
        %v1372 = vsel %vm656, %v1368, 0
        %v1375 = vsel %vm728, %v1370, 0
        %1377 = vmatprep.subr.bf16.mxu0 0
        %1378 = vmatpush1.bf16.msra.mxu0 %v1375
        %1379 = vmatprep.subr.bf16.mxu0 0
        %1380 = vmatpush1.bf16.msra.mxu0 0
        %1381 = vmatprep.subr.bf16.mxu0 0
        %1382 = vmatpush1.bf16.msra.mxu0 0
        %1383 = vmatprep.subr.bf16.mxu0 0
        %1384 = vmatpush1.bf16.msra.mxu0 0
        %1385 = vmatprep.subr.bf16.mxu0 0
        %1386 = vmatpush1.bf16.msra.mxu0 0
        %1387 = vmatprep.subr.bf16.mxu0 0
        %1388 = vmatpush1.bf16.msra.mxu0 0
        %1389 = vmatprep.subr.bf16.mxu0 0
        %1390 = vmatpush1.bf16.msra.mxu0 0
        %1391 = vmatprep.subr.bf16.mxu0 0
        %1392 = vmatpush1.bf16.msra.mxu0 0
        %1393 = vmatprep.subr.bf16.mxu0 0
        %1394 = vmatpush1.bf16.msra.mxu0 0
        %1395 = vmatprep.subr.bf16.mxu0 0
        %1396 = vmatpush1.bf16.msra.mxu0 0
        %1397 = vmatprep.subr.bf16.mxu0 0
        %1398 = vmatpush1.bf16.msra.mxu0 0
        %1399 = vmatprep.subr.bf16.mxu0 0
        %1400 = vmatpush1.bf16.msra.mxu0 0
        %1401 = vmatprep.subr.bf16.mxu0 0
        %1402 = vmatpush1.bf16.msra.mxu0 0
        %1403 = vmatprep.subr.bf16.mxu0 0
        %1404 = vmatpush1.bf16.msra.mxu0 0
        %1405 = vmatprep.subr.bf16.mxu0 0
        %1406 = vmatpush1.bf16.msra.mxu0 0
        %1407 = vmatprep.subr.bf16.mxu0 0
        %1408 = vmatpush1.bf16.msra.mxu0 0
        %1409 = vmatprep.mubr.bf16.mxu0 0
        %1410 = vmatmul.mubr.bf16.gmra.mrb[0].mxu0 %v1372
        %v1411 = vpop.f32.mrb[0].mxu0
        %v1412 = vadd.f32 0.0, %v1411
        %v1413 = vpop.f32.mrb[0].mxu0
        %v1414 = vpop.f32.mrb[0].mxu0
        %v1415 = vpop.f32.mrb[0].mxu0
        %1416 = vdwg.mxu0
        %v1417 = vpack.c.bf16 %v1412, %v1412
        %1418 = vrot.lane.b32.xlu0 %v1300, 120
        %v1419 = vpop.permute.xlu0 %1418
        %1420 = vrot.lane.b32.xlu0 %v1300, 88
        %v1421 = vpop.permute.xlu0 %1420
        %v1423 = vsel %vm656, %v1419, 0
        %v1426 = vsel %vm656, %v1421, 0
        %1428 = vmatprep.subr.bf16.mxu0 0
        %1429 = vmatpush1.bf16.xpose.msra.mxu0 %v1426
        %1430 = vmatprep.subr.bf16.mxu0 0
        %1431 = vmatpush1.bf16.xpose.msra.mxu0 0
        %1432 = vmatprep.subr.bf16.mxu0 0
        %1433 = vmatpush1.bf16.xpose.msra.mxu0 0
        %1434 = vmatprep.subr.bf16.mxu0 0
        %1435 = vmatpush1.bf16.xpose.msra.mxu0 0
        %1436 = vmatprep.subr.bf16.mxu0 0
        %1437 = vmatpush1.bf16.xpose.msra.mxu0 0
        %1438 = vmatprep.subr.bf16.mxu0 0
        %1439 = vmatpush1.bf16.xpose.msra.mxu0 0
        %1440 = vmatprep.subr.bf16.mxu0 0
        %1441 = vmatpush1.bf16.xpose.msra.mxu0 0
        %1442 = vmatprep.subr.bf16.mxu0 0
        %1443 = vmatpush1.bf16.xpose.msra.mxu0 0
        %1444 = vmatprep.subr.bf16.mxu0 0
        %1445 = vmatpush1.bf16.xpose.msra.mxu0 0
        %1446 = vmatprep.subr.bf16.mxu0 0
        %1447 = vmatpush1.bf16.xpose.msra.mxu0 0
        %1448 = vmatprep.subr.bf16.mxu0 0
        %1449 = vmatpush1.bf16.xpose.msra.mxu0 0
        %1450 = vmatprep.subr.bf16.mxu0 0
        %1451 = vmatpush1.bf16.xpose.msra.mxu0 0
        %1452 = vmatprep.subr.bf16.mxu0 0
        %1453 = vmatpush1.bf16.xpose.msra.mxu0 0
        %1454 = vmatprep.subr.bf16.mxu0 0
        %1455 = vmatpush1.bf16.xpose.msra.mxu0 0
        %1456 = vmatprep.subr.bf16.mxu0 0
        %1457 = vmatpush1.bf16.xpose.msra.mxu0 0
        %1458 = vmatprep.subr.bf16.mxu0 0
        %1459 = vmatpush1.bf16.xpose.msra.mxu0 0
        %1460 = vmatprep.mubr.bf16.mxu0 0
        %1461 = vmatmul.mubr.bf16.gmra.mrb[0].mxu0 %v1423
        %v1462 = vpop.f32.mrb[0].mxu0
        %v1463 = vadd.f32 0.0, %v1462
        %v1464 = vpop.f32.mrb[0].mxu0
        %v1465 = vpop.f32.mrb[0].mxu0
        %v1466 = vpop.f32.mrb[0].mxu0
        %1467 = vdwg.mxu0
        %v1468 = vmul.f32 %v1463, 0.35355338
        %v1469 = vadd.f32 %v1468, %v1354
        %v1470 = vsel %vm656, %v1469, -inf
        %1471 = vmax.xlane.f32.xlu0 %v1470
        %v1472 = vpop.xlane.xlu0 %1471
        %v1473 = vsub.f32 %v1469, %v1472
        %v1474 = vmul.f32 %v1473, 1.442695
        %v1475 = vpow.pop %v1474
        %v1476 = vsel %vm656, %v1475, 0.0
        %1477 = vadd.xlane.f32.xlu0 %v1476
        %v1478 = vpop.xlane.xlu0 %1477
        %v1479 = vrcp.pop %v1478
        %v1480 = vmul.f32 %v1475, %v1479
        %v1481 = vpack.c.bf16 %v1480, %v1480
        %1482 = vrot.lane.b32.xlu0 %v1300, 56
        %v1483 = vpop.permute.xlu0 %1482
        %v1485 = vsel %vm656, %v1481, 0
        %v1488 = vsel %vm728, %v1483, 0
        %1490 = vmatprep.subr.bf16.mxu0 0
        %1491 = vmatpush1.bf16.msra.mxu0 %v1488
        %1492 = vmatprep.subr.bf16.mxu0 0
        %1493 = vmatpush1.bf16.msra.mxu0 0
        %1494 = vmatprep.subr.bf16.mxu0 0
        %1495 = vmatpush1.bf16.msra.mxu0 0
        %1496 = vmatprep.subr.bf16.mxu0 0
        %1497 = vmatpush1.bf16.msra.mxu0 0
        %1498 = vmatprep.subr.bf16.mxu0 0
        %1499 = vmatpush1.bf16.msra.mxu0 0
        %1500 = vmatprep.subr.bf16.mxu0 0
        %1501 = vmatpush1.bf16.msra.mxu0 0
        %1502 = vmatprep.subr.bf16.mxu0 0
        %1503 = vmatpush1.bf16.msra.mxu0 0
        %1504 = vmatprep.subr.bf16.mxu0 0
        %1505 = vmatpush1.bf16.msra.mxu0 0
        %1506 = vmatprep.subr.bf16.mxu0 0
        %1507 = vmatpush1.bf16.msra.mxu0 0
        %1508 = vmatprep.subr.bf16.mxu0 0
        %1509 = vmatpush1.bf16.msra.mxu0 0
        %1510 = vmatprep.subr.bf16.mxu0 0
        %1511 = vmatpush1.bf16.msra.mxu0 0
        %1512 = vmatprep.subr.bf16.mxu0 0
        %1513 = vmatpush1.bf16.msra.mxu0 0
        %1514 = vmatprep.subr.bf16.mxu0 0
        %1515 = vmatpush1.bf16.msra.mxu0 0
        %1516 = vmatprep.subr.bf16.mxu0 0
        %1517 = vmatpush1.bf16.msra.mxu0 0
        %1518 = vmatprep.subr.bf16.mxu0 0
        %1519 = vmatpush1.bf16.msra.mxu0 0
        %1520 = vmatprep.subr.bf16.mxu0 0
        %1521 = vmatpush1.bf16.msra.mxu0 0
        %1522 = vmatprep.mubr.bf16.mxu0 0
        %1523 = vmatmul.mubr.bf16.gmra.mrb[0].mxu0 %v1485
        %v1524 = vpop.f32.mrb[0].mxu0
        %v1525 = vadd.f32 0.0, %v1524
        %v1526 = vpop.f32.mrb[0].mxu0
        %v1527 = vpop.f32.mrb[0].mxu0
        %v1528 = vpop.f32.mrb[0].mxu0
        %1529 = vdwg.mxu0
        %v1530 = vpack.c.bf16 %v1525, %v1525
        %v1532 = vsel %vm656, %v1530, 0
        %1534 = vmatprep.subr.bf16.mxu0 0
        %1535 = vmatpush1.bf16.msra.mxu0 %v890
        %1536 = vmatprep.subr.bf16.mxu0 0
        %1537 = vmatpush1.bf16.msra.mxu0 0
        %1538 = vmatprep.subr.bf16.mxu0 0
        %1539 = vmatpush1.bf16.msra.mxu0 0
        %1540 = vmatprep.subr.bf16.mxu0 0
        %1541 = vmatpush1.bf16.msra.mxu0 0
        %1542 = vmatprep.subr.bf16.mxu0 0
        %1543 = vmatpush1.bf16.msra.mxu0 0
        %1544 = vmatprep.subr.bf16.mxu0 0
        %1545 = vmatpush1.bf16.msra.mxu0 0
        %1546 = vmatprep.subr.bf16.mxu0 0
        %1547 = vmatpush1.bf16.msra.mxu0 0
        %1548 = vmatprep.subr.bf16.mxu0 0
        %1549 = vmatpush1.bf16.msra.mxu0 0
        %1550 = vmatprep.subr.bf16.mxu0 0
        %1551 = vmatpush1.bf16.msra.mxu0 0
        %1552 = vmatprep.subr.bf16.mxu0 0
        %1553 = vmatpush1.bf16.msra.mxu0 0
        %1554 = vmatprep.subr.bf16.mxu0 0
        %1555 = vmatpush1.bf16.msra.mxu0 0
        %1556 = vmatprep.subr.bf16.mxu0 0
        %1557 = vmatpush1.bf16.msra.mxu0 0
        %1558 = vmatprep.subr.bf16.mxu0 0
        %1559 = vmatpush1.bf16.msra.mxu0 0
        %1560 = vmatprep.subr.bf16.mxu0 0
        %1561 = vmatpush1.bf16.msra.mxu0 0
        %1562 = vmatprep.subr.bf16.mxu0 0
        %1563 = vmatpush1.bf16.msra.mxu0 0
        %1564 = vmatprep.subr.bf16.mxu0 0
        %1565 = vmatpush1.bf16.msra.mxu0 0
        %1566 = vmatprep.mubr.bf16.mxu0 0
        %1567 = vmatmul.mubr.bf16.gmra.mrb[0].mxu0 %v1532
        %v1568 = vpop.f32.mrb[0].mxu0
        %v1569 = vadd.f32 0.0, %v1568
        %v1570 = vpop.f32.mrb[0].mxu0
        %v1571 = vpop.f32.mrb[0].mxu0
        %v1572 = vpop.f32.mrb[0].mxu0
        %1573 = vdwg.mxu0
        %v1575 = vsel %vm656, %v1417, 0
        %1577 = vmatprep.subr.bf16.mxu0 0
        %1578 = vmatpush1.bf16.msra.mxu0 %v936
        %1579 = vmatprep.subr.bf16.mxu0 0
        %1580 = vmatpush1.bf16.msra.mxu0 0
        %1581 = vmatprep.subr.bf16.mxu0 0
        %1582 = vmatpush1.bf16.msra.mxu0 0
        %1583 = vmatprep.subr.bf16.mxu0 0
        %1584 = vmatpush1.bf16.msra.mxu0 0
        %1585 = vmatprep.subr.bf16.mxu0 0
        %1586 = vmatpush1.bf16.msra.mxu0 0
        %1587 = vmatprep.subr.bf16.mxu0 0
        %1588 = vmatpush1.bf16.msra.mxu0 0
        %1589 = vmatprep.subr.bf16.mxu0 0
        %1590 = vmatpush1.bf16.msra.mxu0 0
        %1591 = vmatprep.subr.bf16.mxu0 0
        %1592 = vmatpush1.bf16.msra.mxu0 0
        %1593 = vmatprep.subr.bf16.mxu0 0
        %1594 = vmatpush1.bf16.msra.mxu0 0
        %1595 = vmatprep.subr.bf16.mxu0 0
        %1596 = vmatpush1.bf16.msra.mxu0 0
        %1597 = vmatprep.subr.bf16.mxu0 0
        %1598 = vmatpush1.bf16.msra.mxu0 0
        %1599 = vmatprep.subr.bf16.mxu0 0
        %1600 = vmatpush1.bf16.msra.mxu0 0
        %1601 = vmatprep.subr.bf16.mxu0 0
        %1602 = vmatpush1.bf16.msra.mxu0 0
        %1603 = vmatprep.subr.bf16.mxu0 0
        %1604 = vmatpush1.bf16.msra.mxu0 0
        %1605 = vmatprep.subr.bf16.mxu0 0
        %1606 = vmatpush1.bf16.msra.mxu0 0
        %1607 = vmatprep.subr.bf16.mxu0 0
        %1608 = vmatpush1.bf16.msra.mxu0 0
        %1609 = vmatprep.mubr.bf16.mxu0 0
        %1610 = vmatmul.mubr.bf16.gmra.mrb[0].mxu0 %v1575
        %v1611 = vpop.f32.mrb[0].mxu0
        %v1612 = vadd.f32 %v1569, %v1611
        %v1613 = vpop.f32.mrb[0].mxu0
        %v1614 = vpop.f32.mrb[0].mxu0
        %v1615 = vpop.f32.mrb[0].mxu0
        %1616 = vdwg.mxu0
        %1617 = vrot.lane.b32.xlu0 %v1300, 112
        %v1618 = vpop.permute.xlu0 %1617
        %1619 = vrot.lane.b32.xlu0 %v1300, 80
        %v1620 = vpop.permute.xlu0 %1619
        %v1622 = vsel %vm656, %v1618, 0
        %v1625 = vsel %vm656, %v1620, 0
        %1627 = vmatprep.subr.bf16.mxu0 0
        %1628 = vmatpush1.bf16.xpose.msra.mxu0 %v1625
        %1629 = vmatprep.subr.bf16.mxu0 0
        %1630 = vmatpush1.bf16.xpose.msra.mxu0 0
        %1631 = vmatprep.subr.bf16.mxu0 0
        %1632 = vmatpush1.bf16.xpose.msra.mxu0 0
        %1633 = vmatprep.subr.bf16.mxu0 0
        %1634 = vmatpush1.bf16.xpose.msra.mxu0 0
        %1635 = vmatprep.subr.bf16.mxu0 0
        %1636 = vmatpush1.bf16.xpose.msra.mxu0 0
        %1637 = vmatprep.subr.bf16.mxu0 0
        %1638 = vmatpush1.bf16.xpose.msra.mxu0 0
        %1639 = vmatprep.subr.bf16.mxu0 0
        %1640 = vmatpush1.bf16.xpose.msra.mxu0 0
        %1641 = vmatprep.subr.bf16.mxu0 0
        %1642 = vmatpush1.bf16.xpose.msra.mxu0 0
        %1643 = vmatprep.subr.bf16.mxu0 0
        %1644 = vmatpush1.bf16.xpose.msra.mxu0 0
        %1645 = vmatprep.subr.bf16.mxu0 0
        %1646 = vmatpush1.bf16.xpose.msra.mxu0 0
        %1647 = vmatprep.subr.bf16.mxu0 0
        %1648 = vmatpush1.bf16.xpose.msra.mxu0 0
        %1649 = vmatprep.subr.bf16.mxu0 0
        %1650 = vmatpush1.bf16.xpose.msra.mxu0 0
        %1651 = vmatprep.subr.bf16.mxu0 0
        %1652 = vmatpush1.bf16.xpose.msra.mxu0 0
        %1653 = vmatprep.subr.bf16.mxu0 0
        %1654 = vmatpush1.bf16.xpose.msra.mxu0 0
        %1655 = vmatprep.subr.bf16.mxu0 0
        %1656 = vmatpush1.bf16.xpose.msra.mxu0 0
        %1657 = vmatprep.subr.bf16.mxu0 0
        %1658 = vmatpush1.bf16.xpose.msra.mxu0 0
        %1659 = vmatprep.mubr.bf16.mxu0 0
        %1660 = vmatmul.mubr.bf16.gmra.mrb[0].mxu0 %v1622
        %v1661 = vpop.f32.mrb[0].mxu0
        %v1662 = vadd.f32 0.0, %v1661
        %v1663 = vpop.f32.mrb[0].mxu0
        %v1664 = vpop.f32.mrb[0].mxu0
        %v1665 = vpop.f32.mrb[0].mxu0
        %1666 = vdwg.mxu0
        %v1667 = vmul.f32 %v1662, 0.35355338
        %v1668 = vadd.f32 %v1667, %v1354
        %v1669 = vsel %vm656, %v1668, -inf
        %1670 = vmax.xlane.f32.xlu0 %v1669
        %v1671 = vpop.xlane.xlu0 %1670
        %v1672 = vsub.f32 %v1668, %v1671
        %v1673 = vmul.f32 %v1672, 1.442695
        %v1674 = vpow.pop %v1673
        %v1675 = vsel %vm656, %v1674, 0.0
        %1676 = vadd.xlane.f32.xlu0 %v1675
        %v1677 = vpop.xlane.xlu0 %1676
        %v1678 = vrcp.pop %v1677
        %v1679 = vmul.f32 %v1674, %v1678
        %v1680 = vpack.c.bf16 %v1679, %v1679
        %1681 = vrot.lane.b32.xlu0 %v1300, 48
        %v1682 = vpop.permute.xlu0 %1681
        %v1684 = vsel %vm656, %v1680, 0
        %v1687 = vsel %vm728, %v1682, 0
        %1689 = vmatprep.subr.bf16.mxu0 0
        %1690 = vmatpush1.bf16.msra.mxu0 %v1687
        %1691 = vmatprep.subr.bf16.mxu0 0
        %1692 = vmatpush1.bf16.msra.mxu0 0
        %1693 = vmatprep.subr.bf16.mxu0 0
        %1694 = vmatpush1.bf16.msra.mxu0 0
        %1695 = vmatprep.subr.bf16.mxu0 0
        %1696 = vmatpush1.bf16.msra.mxu0 0
        %1697 = vmatprep.subr.bf16.mxu0 0
        %1698 = vmatpush1.bf16.msra.mxu0 0
        %1699 = vmatprep.subr.bf16.mxu0 0
        %1700 = vmatpush1.bf16.msra.mxu0 0
        %1701 = vmatprep.subr.bf16.mxu0 0
        %1702 = vmatpush1.bf16.msra.mxu0 0
        %1703 = vmatprep.subr.bf16.mxu0 0
        %1704 = vmatpush1.bf16.msra.mxu0 0
        %1705 = vmatprep.subr.bf16.mxu0 0
        %1706 = vmatpush1.bf16.msra.mxu0 0
        %1707 = vmatprep.subr.bf16.mxu0 0
        %1708 = vmatpush1.bf16.msra.mxu0 0
        %1709 = vmatprep.subr.bf16.mxu0 0
        %1710 = vmatpush1.bf16.msra.mxu0 0
        %1711 = vmatprep.subr.bf16.mxu0 0
        %1712 = vmatpush1.bf16.msra.mxu0 0
        %1713 = vmatprep.subr.bf16.mxu0 0
        %1714 = vmatpush1.bf16.msra.mxu0 0
        %1715 = vmatprep.subr.bf16.mxu0 0
        %1716 = vmatpush1.bf16.msra.mxu0 0
        %1717 = vmatprep.subr.bf16.mxu0 0
        %1718 = vmatpush1.bf16.msra.mxu0 0
        %1719 = vmatprep.subr.bf16.mxu0 0
        %1720 = vmatpush1.bf16.msra.mxu0 0
        %1721 = vmatprep.mubr.bf16.mxu0 0
        %1722 = vmatmul.mubr.bf16.gmra.mrb[0].mxu0 %v1684
        %v1723 = vpop.f32.mrb[0].mxu0
        %v1724 = vadd.f32 0.0, %v1723
        %v1725 = vpop.f32.mrb[0].mxu0
        %v1726 = vpop.f32.mrb[0].mxu0
        %v1727 = vpop.f32.mrb[0].mxu0
        %1728 = vdwg.mxu0
        %v1729 = vpack.c.bf16 %v1724, %v1724
        %v1731 = vsel %vm656, %v1729, 0
        %1733 = vmatprep.subr.bf16.mxu0 0
        %1734 = vmatpush1.bf16.msra.mxu0 %v1095
        %1735 = vmatprep.subr.bf16.mxu0 0
        %1736 = vmatpush1.bf16.msra.mxu0 0
        %1737 = vmatprep.subr.bf16.mxu0 0
        %1738 = vmatpush1.bf16.msra.mxu0 0
        %1739 = vmatprep.subr.bf16.mxu0 0
        %1740 = vmatpush1.bf16.msra.mxu0 0
        %1741 = vmatprep.subr.bf16.mxu0 0
        %1742 = vmatpush1.bf16.msra.mxu0 0
        %1743 = vmatprep.subr.bf16.mxu0 0
        %1744 = vmatpush1.bf16.msra.mxu0 0
        %1745 = vmatprep.subr.bf16.mxu0 0
        %1746 = vmatpush1.bf16.msra.mxu0 0
        %1747 = vmatprep.subr.bf16.mxu0 0
        %1748 = vmatpush1.bf16.msra.mxu0 0
        %1749 = vmatprep.subr.bf16.mxu0 0
        %1750 = vmatpush1.bf16.msra.mxu0 0
        %1751 = vmatprep.subr.bf16.mxu0 0
        %1752 = vmatpush1.bf16.msra.mxu0 0
        %1753 = vmatprep.subr.bf16.mxu0 0
        %1754 = vmatpush1.bf16.msra.mxu0 0
        %1755 = vmatprep.subr.bf16.mxu0 0
        %1756 = vmatpush1.bf16.msra.mxu0 0
        %1757 = vmatprep.subr.bf16.mxu0 0
        %1758 = vmatpush1.bf16.msra.mxu0 0
        %1759 = vmatprep.subr.bf16.mxu0 0
        %1760 = vmatpush1.bf16.msra.mxu0 0
        %1761 = vmatprep.subr.bf16.mxu0 0
        %1762 = vmatpush1.bf16.msra.mxu0 0
        %1763 = vmatprep.subr.bf16.mxu0 0
        %1764 = vmatpush1.bf16.msra.mxu0 0
        %1765 = vmatprep.mubr.bf16.mxu0 0
        %1766 = vmatmul.mubr.bf16.gmra.mrb[0].mxu0 %v1731
        %v1767 = vpop.f32.mrb[0].mxu0
        %v1768 = vadd.f32 0.0, %v1767
        %v1769 = vpop.f32.mrb[0].mxu0
        %v1770 = vpop.f32.mrb[0].mxu0
        %v1771 = vpop.f32.mrb[0].mxu0
        %1772 = vdwg.mxu0
        %v1773 = vadd.f32 %v1612, %v1768
        %1774 = vrot.lane.b32.xlu0 %v1300, 104
        %v1775 = vpop.permute.xlu0 %1774
        %1776 = vrot.lane.b32.xlu0 %v1300, 72
        %v1777 = vpop.permute.xlu0 %1776
        %v1779 = vsel %vm656, %v1775, 0
        %v1782 = vsel %vm656, %v1777, 0
        %1784 = vmatprep.subr.bf16.mxu0 0
        %1785 = vmatpush1.bf16.xpose.msra.mxu0 %v1782
        %1786 = vmatprep.subr.bf16.mxu0 0
        %1787 = vmatpush1.bf16.xpose.msra.mxu0 0
        %1788 = vmatprep.subr.bf16.mxu0 0
        %1789 = vmatpush1.bf16.xpose.msra.mxu0 0
        %1790 = vmatprep.subr.bf16.mxu0 0
        %1791 = vmatpush1.bf16.xpose.msra.mxu0 0
        %1792 = vmatprep.subr.bf16.mxu0 0
        %1793 = vmatpush1.bf16.xpose.msra.mxu0 0
        %1794 = vmatprep.subr.bf16.mxu0 0
        %1795 = vmatpush1.bf16.xpose.msra.mxu0 0
        %1796 = vmatprep.subr.bf16.mxu0 0
        %1797 = vmatpush1.bf16.xpose.msra.mxu0 0
        %1798 = vmatprep.subr.bf16.mxu0 0
        %1799 = vmatpush1.bf16.xpose.msra.mxu0 0
        %1800 = vmatprep.subr.bf16.mxu0 0
        %1801 = vmatpush1.bf16.xpose.msra.mxu0 0
        %1802 = vmatprep.subr.bf16.mxu0 0
        %1803 = vmatpush1.bf16.xpose.msra.mxu0 0
        %1804 = vmatprep.subr.bf16.mxu0 0
        %1805 = vmatpush1.bf16.xpose.msra.mxu0 0
        %1806 = vmatprep.subr.bf16.mxu0 0
        %1807 = vmatpush1.bf16.xpose.msra.mxu0 0
        %1808 = vmatprep.subr.bf16.mxu0 0
        %1809 = vmatpush1.bf16.xpose.msra.mxu0 0
        %1810 = vmatprep.subr.bf16.mxu0 0
        %1811 = vmatpush1.bf16.xpose.msra.mxu0 0
        %1812 = vmatprep.subr.bf16.mxu0 0
        %1813 = vmatpush1.bf16.xpose.msra.mxu0 0
        %1814 = vmatprep.subr.bf16.mxu0 0
        %1815 = vmatpush1.bf16.xpose.msra.mxu0 0
        %1816 = vmatprep.mubr.bf16.mxu0 0
        %1817 = vmatmul.mubr.bf16.gmra.mrb[0].mxu0 %v1779
        %v1818 = vpop.f32.mrb[0].mxu0
        %v1819 = vadd.f32 0.0, %v1818
        %v1820 = vpop.f32.mrb[0].mxu0
        %v1821 = vpop.f32.mrb[0].mxu0
        %v1822 = vpop.f32.mrb[0].mxu0
        %1823 = vdwg.mxu0
        %v1824 = vmul.f32 %v1819, 0.35355338
        %v1825 = vadd.f32 %v1824, %v1354
        %v1826 = vsel %vm656, %v1825, -inf
        %1827 = vmax.xlane.f32.xlu0 %v1826
        %v1828 = vpop.xlane.xlu0 %1827
        %v1829 = vsub.f32 %v1825, %v1828
        %v1830 = vmul.f32 %v1829, 1.442695
        %v1831 = vpow.pop %v1830
        %v1832 = vsel %vm656, %v1831, 0.0
        %1833 = vadd.xlane.f32.xlu0 %v1832
        %v1834 = vpop.xlane.xlu0 %1833
        %v1835 = vrcp.pop %v1834
        %v1836 = vmul.f32 %v1831, %v1835
        %v1837 = vpack.c.bf16 %v1836, %v1836
        %1838 = vrot.lane.b32.xlu0 %v1300, 40
        %v1839 = vpop.permute.xlu0 %1838
        %v1841 = vsel %vm656, %v1837, 0
        %v1844 = vsel %vm728, %v1839, 0
        %1846 = vmatprep.subr.bf16.mxu0 0
        %1847 = vmatpush1.bf16.msra.mxu0 %v1844
        %1848 = vmatprep.subr.bf16.mxu0 0
        %1849 = vmatpush1.bf16.msra.mxu0 0
        %1850 = vmatprep.subr.bf16.mxu0 0
        %1851 = vmatpush1.bf16.msra.mxu0 0
        %1852 = vmatprep.subr.bf16.mxu0 0
        %1853 = vmatpush1.bf16.msra.mxu0 0
        %1854 = vmatprep.subr.bf16.mxu0 0
        %1855 = vmatpush1.bf16.msra.mxu0 0
        %1856 = vmatprep.subr.bf16.mxu0 0
        %1857 = vmatpush1.bf16.msra.mxu0 0
        %1858 = vmatprep.subr.bf16.mxu0 0
        %1859 = vmatpush1.bf16.msra.mxu0 0
        %1860 = vmatprep.subr.bf16.mxu0 0
        %1861 = vmatpush1.bf16.msra.mxu0 0
        %1862 = vmatprep.subr.bf16.mxu0 0
        %1863 = vmatpush1.bf16.msra.mxu0 0
        %1864 = vmatprep.subr.bf16.mxu0 0
        %1865 = vmatpush1.bf16.msra.mxu0 0
        %1866 = vmatprep.subr.bf16.mxu0 0
        %1867 = vmatpush1.bf16.msra.mxu0 0
        %1868 = vmatprep.subr.bf16.mxu0 0
        %1869 = vmatpush1.bf16.msra.mxu0 0
        %1870 = vmatprep.subr.bf16.mxu0 0
        %1871 = vmatpush1.bf16.msra.mxu0 0
        %1872 = vmatprep.subr.bf16.mxu0 0
        %1873 = vmatpush1.bf16.msra.mxu0 0
        %1874 = vmatprep.subr.bf16.mxu0 0
        %1875 = vmatpush1.bf16.msra.mxu0 0
        %1876 = vmatprep.subr.bf16.mxu0 0
        %1877 = vmatpush1.bf16.msra.mxu0 0
        %1878 = vmatprep.mubr.bf16.mxu0 0
        %1879 = vmatmul.mubr.bf16.gmra.mrb[0].mxu0 %v1841
        %v1880 = vpop.f32.mrb[0].mxu0
        %v1881 = vadd.f32 0.0, %v1880
        %v1882 = vpop.f32.mrb[0].mxu0
        %v1883 = vpop.f32.mrb[0].mxu0
        %v1884 = vpop.f32.mrb[0].mxu0
        %1885 = vdwg.mxu0
        %v1886 = vpack.c.bf16 %v1881, %v1881
        %v1888 = vsel %vm656, %v1886, 0
        %1890 = vmatprep.subr.bf16.mxu0 0
        %1891 = vmatpush1.bf16.msra.mxu0 %v1255
        %1892 = vmatprep.subr.bf16.mxu0 0
        %1893 = vmatpush1.bf16.msra.mxu0 0
        %1894 = vmatprep.subr.bf16.mxu0 0
        %1895 = vmatpush1.bf16.msra.mxu0 0
        %1896 = vmatprep.subr.bf16.mxu0 0
        %1897 = vmatpush1.bf16.msra.mxu0 0
        %1898 = vmatprep.subr.bf16.mxu0 0
        %1899 = vmatpush1.bf16.msra.mxu0 0
        %1900 = vmatprep.subr.bf16.mxu0 0
        %1901 = vmatpush1.bf16.msra.mxu0 0
        %1902 = vmatprep.subr.bf16.mxu0 0
        %1903 = vmatpush1.bf16.msra.mxu0 0
        %1904 = vmatprep.subr.bf16.mxu0 0
        %1905 = vmatpush1.bf16.msra.mxu0 0
        %1906 = vmatprep.subr.bf16.mxu0 0
        %1907 = vmatpush1.bf16.msra.mxu0 0
        %1908 = vmatprep.subr.bf16.mxu0 0
        %1909 = vmatpush1.bf16.msra.mxu0 0
        %1910 = vmatprep.subr.bf16.mxu0 0
        %1911 = vmatpush1.bf16.msra.mxu0 0
        %1912 = vmatprep.subr.bf16.mxu0 0
        %1913 = vmatpush1.bf16.msra.mxu0 0
        %1914 = vmatprep.subr.bf16.mxu0 0
        %1915 = vmatpush1.bf16.msra.mxu0 0
        %1916 = vmatprep.subr.bf16.mxu0 0
        %1917 = vmatpush1.bf16.msra.mxu0 0
        %1918 = vmatprep.subr.bf16.mxu0 0
        %1919 = vmatpush1.bf16.msra.mxu0 0
        %1920 = vmatprep.subr.bf16.mxu0 0
        %1921 = vmatpush1.bf16.msra.mxu0 0
        %1922 = vmatprep.mubr.bf16.mxu0 0
        %1923 = vmatmul.mubr.bf16.gmra.mrb[0].mxu0 %v1888
        %v1924 = vpop.f32.mrb[0].mxu0
        %v1925 = vadd.f32 0.0, %v1924
        %v1926 = vpop.f32.mrb[0].mxu0
        %v1927 = vpop.f32.mrb[0].mxu0
        %v1928 = vpop.f32.mrb[0].mxu0
        %1929 = vdwg.mxu0
        %v1930 = vadd.f32 %v1773, %v1925
        %v1931 = vadd.f32 %v521, %v1297
        %v1932 = vadd.f32 %v522, %v1930
        %v1933 = vlaneseq
        %v1934 = vshrl.u32 %v1933, 7
        %v1935 = vsub.s32 4, %v1934
        %v1936 = vrot.slane %v523, %v1935
        %v1937 = vadd.f32 %v1931, %v1936
        %v1938 = vadd.f32 %v1932, %v1936
        %v1939 = vsel %vm524, %v1937, 0.0
        %1940 = vadd.xlane.f32.xlu0 %v1939
        %v1941 = vpop.xlane.xlu0 %1940
        %v1942 = vsel %vm524, %v1938, 0.0
        %1943 = vadd.xlane.f32.xlu0 %v1942
        %v1944 = vpop.xlane.xlu0 %1943
        %v1945 = vmul.f32 %v1941, %v531
        %v1946 = vmul.f32 %v1944, %v531
        %v1947 = vsub.f32 %v1937, %v1945
        %v1948 = vsub.f32 %v1938, %v1946
        %v1949 = vmul.f32 %v1947, %v1947
        %v1950 = vmul.f32 %v1948, %v1948
        %v1951 = vsel %vm524, %v1949, 0.0
        %1952 = vadd.xlane.f32.xlu0 %v1951
        %v1953 = vpop.xlane.xlu0 %1952
        %v1954 = vsel %vm524, %v1950, 0.0
        %1955 = vadd.xlane.f32.xlu0 %v1954
        %v1956 = vpop.xlane.xlu0 %1955
        %v1957 = vmul.f32 %v1953, %v544
        %v1958 = vmul.f32 %v1956, %v544
        %v1959 = vrsqrt.pop %v1957
        %v1960 = vmul.f32 %v1957, %v1959
        %vm1961 = vcmp.eq.f32.partialorder %v1957, inf
        %v1962 = vsel %vm1961, %v1957, %v1960
        %vm1963 = vcmp.eq.f32.partialorder %v1957, 0.0
        %v1964 = vand.u32 %v1957, 2147483648
        %v1965 = vsel %vm1963, %v1964, %v1962
        %v1966 = vrsqrt.pop %v1958
        %v1967 = vmul.f32 %v1958, %v1966
        %vm1968 = vcmp.eq.f32.partialorder %v1958, inf
        %v1969 = vsel %vm1968, %v1958, %v1967
        %vm1970 = vcmp.eq.f32.partialorder %v1958, 0.0
        %v1971 = vand.u32 %v1958, 2147483648
        %v1972 = vsel %vm1970, %v1971, %v1969
        %v1973 = vlaneseq
        %v1974 = vshrl.u32 %v1973, 7
        %v1975 = vsub.s32 2, %v1974
        %v1976 = vrot.slane %v523, %v1975
        %v1977 = vmul.f32 %v1976, %v1947
        %v1978 = vmul.f32 %v1976, %v1948
        %v1979 = vadd.f32 %v1965, 1e-06
        %v1980 = vadd.f32 %v1972, 1e-06
        %v1981 = vrcp.pop %v1979
        %v1982 = vmul.f32 %v1977, %v1981
        %v1983 = vrcp.pop %v1980
        %v1984 = vmul.f32 %v1978, %v1983
        %v1985 = vlaneseq
        %v1986 = vshrl.u32 %v1985, 7
        %v1987 = vsub.s32 3, %v1986
        %v1988 = vrot.slane %v523, %v1987
        %v1989 = vadd.f32 %v1982, %v1988
        %v1990 = vadd.f32 %v1984, %v1988
        %v1991 = vpack.c.bf16 %v1990, %v1989
        %v1992 = vld [vmem:[%s496] sm:$0xf]
        %v1993 = vld [vmem:[%s496 + $0x4] sm:$0xf]
        %v1994 = vld [vmem:[%s496 + $0x8] sm:$0xf]
        %v1995 = vld [vmem:[%s496 + $0xc] sm:$0xf]
        %v1996 = vld [vmem:[%s499] sm:$0x1]
        %v1998 = vlaneseq
        %v1999 = vshrl.u32 %v1998, 7
        %v2000 = vsub.s32 0, %v1999
        %v2001 = vrot.slane %v1996, %v2000
        %v2007 = vunpack.c.l.b16 %v1992
        %v2008 = vunpack.c.l.b16 %v1993
        %v2009 = vunpack.c.l.b16 %v1994
        %v2010 = vunpack.c.l.b16 %v1995
        %v2011 = vpack.c.b16 %v2008, %v2007
        %v2012 = vpack.c.b16 %v2010, %v2009
        %v2016 = vsel %vm524, %v1991, 0
        %2018 = vmatprep.subr.bf16.mxu0 0
        %2019 = vmatpush1.bf16.msra.mxu0 %v2011
        %2020 = vmatprep.subr.bf16.mxu0 0
        %2021 = vmatpush1.bf16.msra.mxu0 %v2012
        %2022 = vmatprep.subr.bf16.mxu0 0
        %2023 = vmatpush1.bf16.msra.mxu0 0
        %2024 = vmatprep.subr.bf16.mxu0 0
        %2025 = vmatpush1.bf16.msra.mxu0 0
        %2026 = vmatprep.subr.bf16.mxu0 0
        %2027 = vmatpush1.bf16.msra.mxu0 0
        %2028 = vmatprep.subr.bf16.mxu0 0
        %2029 = vmatpush1.bf16.msra.mxu0 0
        %2030 = vmatprep.subr.bf16.mxu0 0
        %2031 = vmatpush1.bf16.msra.mxu0 0
        %2032 = vmatprep.subr.bf16.mxu0 0
        %2033 = vmatpush1.bf16.msra.mxu0 0
        %2034 = vmatprep.subr.bf16.mxu0 0
        %2035 = vmatpush1.bf16.msra.mxu0 0
        %2036 = vmatprep.subr.bf16.mxu0 0
        %2037 = vmatpush1.bf16.msra.mxu0 0
        %2038 = vmatprep.subr.bf16.mxu0 0
        %2039 = vmatpush1.bf16.msra.mxu0 0
        %2040 = vmatprep.subr.bf16.mxu0 0
        %2041 = vmatpush1.bf16.msra.mxu0 0
        %2042 = vmatprep.subr.bf16.mxu0 0
        %2043 = vmatpush1.bf16.msra.mxu0 0
        %2044 = vmatprep.subr.bf16.mxu0 0
        %2045 = vmatpush1.bf16.msra.mxu0 0
        %2046 = vmatprep.subr.bf16.mxu0 0
        %2047 = vmatpush1.bf16.msra.mxu0 0
        %2048 = vmatprep.subr.bf16.mxu0 0
        %2049 = vmatpush1.bf16.msra.mxu0 0
        %2050 = vmatprep.mubr.bf16.mxu0 0
        %2051 = vmatmul.mubr.bf16.gmra.mrb[0].mxu0 %v2016
        %v2052 = vpop.f32.mrb[0].mxu0
        %v2053 = vadd.f32 %v2001, %v2052
        %v2054 = vpop.f32.mrb[0].mxu0
        %v2055 = vpop.f32.mrb[0].mxu0
        %v2056 = vadd.f32 %v2001, %v2055
        %v2057 = vpop.f32.mrb[0].mxu0
        %2058 = vdwg.mxu0
        %v2059 = vmax.f32 %v2053, 0.0
        %v2060 = vmax.f32 %v2056, 0.0
        %v2061 = vpack.c.bf16 %v2060, %v2059
        %v2062 = vld [vmem:[%s504] sm:$0xf]
        %v2063 = vld [vmem:[%s504 + $0x4] sm:$0xf]
        %v2064 = vld [vmem:[%s504 + $0x8] sm:$0xf]
        %v2065 = vld [vmem:[%s504 + $0xc] sm:$0xf]
        %v2066 = vld [vmem:[%s504 + $0x10] sm:$0xf]
        %v2067 = vld [vmem:[%s504 + $0x14] sm:$0xf]
        %v2068 = vld [vmem:[%s504 + $0x18] sm:$0xf]
        %v2069 = vld [vmem:[%s504 + $0x1c] sm:$0xf]
        %v2070 = vlaneseq
        %v2071 = vshrl.u32 %v2070, 7
        %v2072 = vsub.s32 5, %v2071
        %v2073 = vrot.slane %v523, %v2072
        %v2082 = vunpack.c.l.b16 %v2062
        %v2083 = vunpack.c.l.b16 %v2063
        %v2084 = vunpack.c.l.b16 %v2064
        %v2085 = vunpack.c.l.b16 %v2065
        %v2086 = vunpack.c.l.b16 %v2066
        %v2087 = vunpack.c.l.b16 %v2067
        %v2088 = vunpack.c.l.b16 %v2068
        %v2089 = vunpack.c.l.b16 %v2069
        %v2090 = vpack.c.b16 %v2083, %v2082
        %v2091 = vpack.c.b16 %v2085, %v2084
        %v2092 = vpack.c.b16 %v2087, %v2086
        %v2093 = vpack.c.b16 %v2089, %v2088
        %vm2098 = vcmask 523264
        %v2100 = vsel %vm2098, %v2061, 0
        %2102 = vmatprep.subr.bf16.mxu0 0
        %2103 = vmatpush1.bf16.msra.mxu0 %v2090
        %2104 = vmatprep.subr.bf16.mxu0 0
        %2105 = vmatpush1.bf16.msra.mxu0 %v2091
        %2106 = vmatprep.subr.bf16.mxu0 0
        %2107 = vmatpush1.bf16.msra.mxu0 %v2092
        %2108 = vmatprep.subr.bf16.mxu0 0
        %2109 = vmatpush1.bf16.msra.mxu0 %v2093
        %2110 = vmatprep.subr.bf16.mxu0 0
        %2111 = vmatpush1.bf16.msra.mxu0 0
        %2112 = vmatprep.subr.bf16.mxu0 0
        %2113 = vmatpush1.bf16.msra.mxu0 0
        %2114 = vmatprep.subr.bf16.mxu0 0
        %2115 = vmatpush1.bf16.msra.mxu0 0
        %2116 = vmatprep.subr.bf16.mxu0 0
        %2117 = vmatpush1.bf16.msra.mxu0 0
        %2118 = vmatprep.subr.bf16.mxu0 0
        %2119 = vmatpush1.bf16.msra.mxu0 0
        %2120 = vmatprep.subr.bf16.mxu0 0
        %2121 = vmatpush1.bf16.msra.mxu0 0
        %2122 = vmatprep.subr.bf16.mxu0 0
        %2123 = vmatpush1.bf16.msra.mxu0 0
        %2124 = vmatprep.subr.bf16.mxu0 0
        %2125 = vmatpush1.bf16.msra.mxu0 0
        %2126 = vmatprep.subr.bf16.mxu0 0
        %2127 = vmatpush1.bf16.msra.mxu0 0
        %2128 = vmatprep.subr.bf16.mxu0 0
        %2129 = vmatpush1.bf16.msra.mxu0 0
        %2130 = vmatprep.subr.bf16.mxu0 0
        %2131 = vmatpush1.bf16.msra.mxu0 0
        %2132 = vmatprep.subr.bf16.mxu0 0
        %2133 = vmatpush1.bf16.msra.mxu0 0
        %2134 = vmatprep.mubr.bf16.mxu0 0
        %2135 = vmatmul.mubr.bf16.gmra.mrb[0].mxu0 %v2100
        %v2136 = vpop.f32.mrb[0].mxu0
        %v2137 = vadd.f32 %v2073, %v2136
        %v2138 = vpop.f32.mrb[0].mxu0
        %v2139 = vpop.f32.mrb[0].mxu0
        %v2140 = vadd.f32 %v2073, %v2139
        %v2141 = vpop.f32.mrb[0].mxu0
        %2142 = vdwg.mxu0
        %v2143 = vadd.f32 %v1937, %v2137
        %v2144 = vadd.f32 %v1938, %v2140
        %2145 = vst.msk [vmem:[#allocation2] sm:$0xff] %vm524, %v2143
        %2146 = vst.msk [vmem:[#allocation2 + $0x8] sm:$0xff] %vm524, %v2144
        %p2147 = scmp.eq.s32.totalorder %s27, 1
        // Predicated region
        $region65: #{tpu_custom_call.1} parent=59 // pred_check
          %p2148 = pneg %p2147
        $region66: #{tpu_custom_call.1} parent=59 // pred_check_branch
          %2150 = sbr.rel (%p2148) target = $region68
        $region67: #{tpu_custom_call.1} parent=59 // pred_region
          %v2151 = vld [vmem:[%s9] sm:$0x1]
          %v2152 = vld [vmem:[%s9 + $0x1] sm:$0x1]
          %v2153 = vsel %vm524, %v2143, 0.0
          %2154 = vadd.xlane.f32.xlu0 %v2153
          %v2155 = vpop.xlane.xlu0 %2154
          %v2156 = vsel %vm524, %v2144, 0.0
          %2157 = vadd.xlane.f32.xlu0 %v2156
          %v2158 = vpop.xlane.xlu0 %2157
          %v2159 = vmul.f32 %v2155, %v531
          %v2160 = vmul.f32 %v2158, %v531
          %v2161 = vsub.f32 %v2143, %v2159
          %v2162 = vsub.f32 %v2144, %v2160
          %v2163 = vmul.f32 %v2161, %v2161
          %v2164 = vmul.f32 %v2162, %v2162
          %v2165 = vsel %vm524, %v2163, 0.0
          %2166 = vadd.xlane.f32.xlu0 %v2165
          %v2167 = vpop.xlane.xlu0 %2166
          %v2168 = vsel %vm524, %v2164, 0.0
          %2169 = vadd.xlane.f32.xlu0 %v2168
          %v2170 = vpop.xlane.xlu0 %2169
          %v2171 = vmul.f32 %v2167, %v544
          %v2172 = vmul.f32 %v2170, %v544
          %v2173 = vrsqrt.pop %v2171
          %v2174 = vmul.f32 %v2171, %v2173
          %vm2175 = vcmp.eq.f32.partialorder %v2171, inf
          %v2176 = vsel %vm2175, %v2171, %v2174
          %vm2177 = vcmp.eq.f32.partialorder %v2171, 0.0
          %v2178 = vand.u32 %v2171, 2147483648
          %v2179 = vsel %vm2177, %v2178, %v2176
          %v2180 = vrsqrt.pop %v2172
          %v2181 = vmul.f32 %v2172, %v2180
          %vm2182 = vcmp.eq.f32.partialorder %v2172, inf
          %v2183 = vsel %vm2182, %v2172, %v2181
          %vm2184 = vcmp.eq.f32.partialorder %v2172, 0.0
          %v2185 = vand.u32 %v2172, 2147483648
          %v2186 = vsel %vm2184, %v2185, %v2183
          %v2187 = vlaneseq
          %v2188 = vshrl.u32 %v2187, 7
          %v2189 = vsub.s32 0, %v2188
          %v2190 = vrot.slane %v2151, %v2189
          %v2191 = vmul.f32 %v2190, %v2161
          %v2192 = vmul.f32 %v2190, %v2162
          %v2193 = vadd.f32 %v2179, 1e-06
          %v2194 = vadd.f32 %v2186, 1e-06
          %v2195 = vrcp.pop %v2193
          %v2196 = vmul.f32 %v2191, %v2195
          %v2197 = vrcp.pop %v2194
          %v2198 = vmul.f32 %v2192, %v2197
          %v2199 = vlaneseq
          %v2200 = vshrl.u32 %v2199, 7
          %v2201 = vsub.s32 0, %v2200
          %v2202 = vrot.slane %v2152, %v2201
          %v2203 = vadd.f32 %v2196, %v2202
          %v2204 = vadd.f32 %v2198, %v2202
          %2205 = vst.msk [vmem:[#allocation3] sm:$0xff] %vm524, %v2203
          %s2206 = scalar_lea.vmem [#allocation3], 8
          %2207 = vst.msk [vmem:[%s2206] sm:$0xff] %vm524, %v2204
        $region68: #{tpu_custom_call.1} parent=59 // pred_fallthru
          _
        // Predicated region
        $region69: #{tpu_custom_call.1} parent=59 // pred_check
          %p2208 = pneg %p307
        $region70: #{tpu_custom_call.1} parent=59 // pred_check_branch
          %2210 = sbr.rel (%p2208) target = $region72
        $region71: #{tpu_custom_call.1} parent=59 // pred_region
          %s2211 = smul.u32 2, %s26
          %s2213 = ssub.s32 256, 256
          %2214 = vsyncadd [#allocation4], %s2213
          %s2215 = smul.addr %s2211, 128
          %s2216 = scalar_lea.hbm %s10, %s2215
          %s2217 = sshll.u32 [#allocation3], 4
          %s2218 = int_to_ptr.vmem [resolvable:$true] %s2217
          %2223 = dma.vmem_to_hbm [thread:$0]  %s2218, 256, %s2216, [#allocation4], 128, 128, 8
        $region72: #{tpu_custom_call.1} parent=59 // pred_fallthru
          _
        // Predicated region
        $region73: #{tpu_custom_call.1} parent=59 // pred_check
          %p2224 = pneg %p307
        $region74: #{tpu_custom_call.1} parent=59 // pred_check_branch
          %2226 = sbr.rel (%p2224) target = $region76
        $region75: #{tpu_custom_call.1} parent=59 // pred_region
          %2227 = dma.done [#allocation4], 256
        $region76: #{tpu_custom_call.1} parent=59 // pred_fallthru
          _
      $region60: #{tpu_custom_call.1} parent=5 // pred_fallthru
        _
      %p2228 = scmp.le.s32.totalorder 2, %s17
      // Predicated region
      $region77: #{tpu_custom_call.1} parent=5 // pred_check
        %p2229 = pneg %p2228
      $region78: #{tpu_custom_call.1} parent=5 // pred_check_branch
        %2231 = sbr.rel (%p2229) target = $region80
      $region79: #{tpu_custom_call.1} parent=5 // pred_region
        %s2232 = ssub.s32 %s17, 2
      $region80: #{tpu_custom_call.1} parent=5 // pred_fallthru
        _
    $region6: #{tpu_custom_call.1} parent=1 // loop_footer
      %s21 = sadd.s32 1, %s17
    $region7: #{tpu_custom_call.1} parent=1 // loop_footer_branch
      %16 = sbr.rel target = $region3
    $region8: #{tpu_custom_call.1} parent=1 // loop_exit
      _
    %2233 = vsyncpa [#allocation4], 1
    %s2234 = scalar_lea.sflag [#allocation4], 1
    %2235 = vsyncpa %s2234, 1

</llo_original>
